<compile_context>
chip_gen: v5e
topology: v5e:2x2
jax: 0.10.0
libtpu: 0.0.40
codegen_flags: <defaults>
</compile_context>

<pallas_src>
from functools import partial

import jax
import jax.numpy as jnp
from jax.experimental import pallas as pl
from jax.experimental.pallas import tpu as pltpu

LANE = 128                     # lane width (last dim)
SUBLANE = 8                    # f32 sublane count (second-minor dim)
COMPUTE_DTYPE = jnp.bfloat16   # MXU-native operand dtype on v5e/v6e/v7x

_COMPILER_PARAMS = pltpu.CompilerParams(vmem_limit_bytes=64 * 1024 * 1024)


def _round_up(x, m):
    return ((x + m - 1) // m) * m


def _full_spec(a):
    nd = a.ndim
    return pl.BlockSpec(a.shape, lambda: (0,) * nd)


# ----------------------------------------------------------------------------
# Kernel bodies
# ----------------------------------------------------------------------------
def _mlp(x_ref, w1_ref, b1_ref, w2_ref, b2_ref, o_ref):
    # x is f32 in VMEM; cast to bf16 on the VPU right before the MXU.
    x = x_ref[...].astype(COMPUTE_DTYPE)
    h = jnp.dot(x, w1_ref[...], preferred_element_type=jnp.float32) + b1_ref[...]
    h = jnp.maximum(h, 0.0)                         # f32 epilogue (v5e-safe)
    y = jnp.dot(h.astype(COMPUTE_DTYPE), w2_ref[...],
                preferred_element_type=jnp.float32) + b2_ref[...]
    o_ref[...] = y.astype(o_ref.dtype)


def _triplet_kernel(eeg_ref, img1_ref, img2_ref,
                    we1_ref, be1_ref, we2_ref, be2_ref,
                    wi1_ref, bi1_ref, wi2_ref, bi2_ref,
                    oe_ref, o1_ref, o2_ref):
    _mlp(eeg_ref, we1_ref, be1_ref, we2_ref, be2_ref, oe_ref)
    # img1 & img2 share the same image-encoder weight refs (single weight DMA).
    _mlp(img1_ref, wi1_ref, bi1_ref, wi2_ref, bi2_ref, o1_ref)
    _mlp(img2_ref, wi1_ref, bi1_ref, wi2_ref, bi2_ref, o2_ref)


def _encoder_kernel(x_ref, w1_ref, b1_ref, w2_ref, b2_ref, o_ref):
    _mlp(x_ref, w1_ref, b1_ref, w2_ref, b2_ref, o_ref)


# ----------------------------------------------------------------------------
# One-time weight preparation (hoisted out of the per-call path)
# ----------------------------------------------------------------------------
def prepare_encoder_params(p):
    in_dim, hidden = p["w1"].shape
    embed = p["w2"].shape[1]
    h_pad = _round_up(max(hidden, LANE), LANE)
    e_pad = _round_up(max(embed, LANE), LANE)
    return {
        "w1": jnp.pad(p["w1"], ((0, 0), (0, h_pad - hidden))).astype(COMPUTE_DTYPE),
        "b1": jnp.pad(p["b1"], ((0, 0), (0, h_pad - hidden))).astype(jnp.float32),
        "w2": jnp.pad(p["w2"], ((0, h_pad - hidden), (0, e_pad - embed))).astype(COMPUTE_DTYPE),
        "b2": jnp.pad(p["b2"], ((0, 0), (0, e_pad - embed))).astype(jnp.float32),
    }


def prepare_params(params):
    return {"eeg_encoder": prepare_encoder_params(params["eeg_encoder"]),
            "img_encoder": prepare_encoder_params(params["img_encoder"])}


# ----------------------------------------------------------------------------
# Wrapper helpers
# ----------------------------------------------------------------------------
def _flatten_pad_rows(x, b_pad):
    b = x.shape[0]
    xf = x.reshape(b, -1)                         # row-major, == torch .view(B,-1)
    return jnp.pad(xf, ((0, b_pad - b), (0, 0)))  # sublane-dense rows


def _encoder_flops(rows, enc):
    d_in, h_pad = enc["w1"].shape
    e_pad = enc["w2"].shape[1]
    return 2 * rows * (d_in * h_pad + h_pad * e_pad)


def _encoder_weight_bytes(enc):
    return sum(int(enc[k].size) * enc[k].dtype.itemsize
               for k in ("w1", "b1", "w2", "b2"))


# ----------------------------------------------------------------------------
# TripletNet forward: ONE pallas_call, three lane-dense output slabs
# ----------------------------------------------------------------------------
def _triplet_padded(prepared, eeg, img1, img2):
    ep, ip = prepared["eeg_encoder"], prepared["img_encoder"]
    B = eeg.shape[0]
    B_pad = _round_up(max(B, SUBLANE), SUBLANE)

    eeg_f = _flatten_pad_rows(eeg, B_pad)     # f32, cast to bf16 inside kernel
    img1_f = _flatten_pad_rows(img1, B_pad)
    img2_f = _flatten_pad_rows(img2, B_pad)

    e_pad_e = ep["w2"].shape[1]
    e_pad_i = ip["w2"].shape[1]

    ins = (eeg_f, img1_f, img2_f,
           ep["w1"], ep["b1"], ep["w2"], ep["b2"],
           ip["w1"], ip["b1"], ip["w2"], ip["b2"])

    flops = (_encoder_flops(B_pad, ep) + 2 * _encoder_flops(B_pad, ip))
    bytes_accessed = (4 * (eeg_f.size + img1_f.size + img2_f.size)
                      + _encoder_weight_bytes(ep) + _encoder_weight_bytes(ip)
                      + 4 * B_pad * (e_pad_e + 2 * e_pad_i))
    cost = pl.CostEstimate(flops=flops, transcendentals=0,
                           bytes_accessed=bytes_accessed)

    out_shape = (jax.ShapeDtypeStruct((B_pad, e_pad_e), jnp.float32),
                 jax.ShapeDtypeStruct((B_pad, e_pad_i), jnp.float32),
                 jax.ShapeDtypeStruct((B_pad, e_pad_i), jnp.float32))
    out_specs = (pl.BlockSpec((B_pad, e_pad_e), lambda: (0, 0)),
                 pl.BlockSpec((B_pad, e_pad_i), lambda: (0, 0)),
                 pl.BlockSpec((B_pad, e_pad_i), lambda: (0, 0)))

    return pl.pallas_call(
        _triplet_kernel,
        out_shape=out_shape,
        grid=(),
        in_specs=[_full_spec(a) for a in ins],
        out_specs=out_specs,
        cost_estimate=cost,
        compiler_params=_COMPILER_PARAMS,
    )(*ins)


# Lane/sublane-padded slabs (no post-slice copies) for latency-sensitive callers.
triplet_net_forward_padded = jax.jit(_triplet_padded)


@partial(jax.jit, static_argnames=("embed_dim",))
def triplet_net_forward(prepared, eeg, img1, img2, *, embed_dim):
    B = eeg.shape[0]
    oe, o1, o2 = _triplet_padded(prepared, eeg, img1, img2)
    # Slices kept only for API parity with the PyTorch module's return shapes;
    # use triplet_net_forward_padded to avoid them.
    return oe[:B, :embed_dim], o1[:B, :embed_dim], o2[:B, :embed_dim]


# ----------------------------------------------------------------------------
# Single-encoder helpers (get_eeg_embedding / get_img_embedding)
# ----------------------------------------------------------------------------
def _encode_padded(enc, x):
    B = x.shape[0]
    B_pad = _round_up(max(B, SUBLANE), SUBLANE)
    xf = _flatten_pad_rows(x, B_pad)
    e_pad = enc["w2"].shape[1]
    ins = (xf, enc["w1"], enc["b1"], enc["w2"], enc["b2"])
    cost = pl.CostEstimate(
        flops=_encoder_flops(B_pad, enc), transcendentals=0,
        bytes_accessed=4 * xf.size + _encoder_weight_bytes(enc) + 4 * B_pad * e_pad)
    return pl.pallas_call(
        _encoder_kernel,
        out_shape=jax.ShapeDtypeStruct((B_pad, e_pad), jnp.float32),
        grid=(),
        in_specs=[_full_spec(a) for a in ins],
        out_specs=pl.BlockSpec((B_pad, e_pad), lambda: (0, 0)),
        cost_estimate=cost,
        compiler_params=_COMPILER_PARAMS,
    )(*ins)


@partial(jax.jit, static_argnames=("embed_dim",))
def get_eeg_embedding(prepared, eeg, *, embed_dim):
    return _encode_padded(prepared["eeg_encoder"], eeg)[:eeg.shape[0], :embed_dim]


@partial(jax.jit, static_argnames=("embed_dim",))
def get_img_embedding(prepared, img, *, embed_dim):
    return _encode_padded(prepared["img_encoder"], img)[:img.shape[0], :embed_dim]


# ----------------------------------------------------------------------------
# Parameter construction (deterministic, in-script) + pure-JAX f32 reference
# ----------------------------------------------------------------------------
def init_encoder_params(key, in_dim, hidden_dim, embed_dim):
    k1, k2, k3, k4 = jax.random.split(key, 4)
    s1 = 1.0 / jnp.sqrt(in_dim)
    s2 = 1.0 / jnp.sqrt(hidden_dim)
    return {
        "w1": jax.random.uniform(k1, (in_dim, hidden_dim), jnp.float32, -s1, s1),
        "b1": jax.random.uniform(k2, (1, hidden_dim), jnp.float32, -s1, s1),
        "w2": jax.random.uniform(k3, (hidden_dim, embed_dim), jnp.float32, -s2, s2),
        "b2": jax.random.uniform(k4, (1, embed_dim), jnp.float32, -s2, s2),
    }


def _ref_mlp(x_flat, p):
    h = jnp.maximum(x_flat @ p["w1"] + p["b1"], 0.0)
    return h @ p["w2"] + p["b2"]


if __name__ == "__main__":
    key = jax.random.PRNGKey(0)
    k_eeg_p, k_img_p, k_eeg, k_i1, k_i2 = jax.random.split(key, 5)

    # Small shapes implied by the forward: EEG (B, C, T), images NCHW.
    B, C_eeg, T = 2, 4, 16          # eeg -> 64 features
    C_img, H, W = 4, 16, 16         # img -> 1024 features
    hidden_dim, embed_dim = 32, 16

    params = {
        "eeg_encoder": init_encoder_params(k_eeg_p, C_eeg * T, hidden_dim, embed_dim),
        "img_encoder": init_encoder_params(k_img_p, C_img * H * W, hidden_dim, embed_dim),
    }
    # One-time weight prep (bf16 cast + zero lane padding), outside per-call path.
    prepared = jax.tree_util.tree_map(lambda a: a, prepare_params(params))

    eeg = jax.random.normal(k_eeg, (B, C_eeg, T), jnp.float32)
    img1 = jax.random.normal(k_i1, (B, C_img, H, W), jnp.float32)
    img2 = jax.random.normal(k_i2, (B, C_img, H, W), jnp.float32)

    eeg_e, img1_e, img2_e = triplet_net_forward(prepared, eeg, img1, img2,
                                                embed_dim=embed_dim)
    jax.block_until_ready((eeg_e, img1_e, img2_e))

    # Correctness vs. f32 reference (bf16 MXU operands -> loose tolerance).
    ref_eeg = _ref_mlp(eeg.reshape(B, -1), params["eeg_encoder"])
    ref_i1 = _ref_mlp(img1.reshape(B, -1), params["img_encoder"])
    ref_i2 = _ref_mlp(img2.reshape(B, -1), params["img_encoder"])
    assert eeg_e.shape == (B, embed_dim)
    assert img1_e.shape == (B, embed_dim)
    assert img2_e.shape == (B, embed_dim)
    assert jnp.allclose(eeg_e, ref_eeg, atol=3e-2, rtol=3e-2)
    assert jnp.allclose(img1_e, ref_i1, atol=3e-2, rtol=3e-2)
    assert jnp.allclose(img2_e, ref_i2, atol=3e-2, rtol=3e-2)

    # Padded-slab variant (no post-slice copies): valid region must match.
    pe, p1, p2 = triplet_net_forward_padded(prepared, eeg, img1, img2)
    jax.block_until_ready((pe, p1, p2))
    assert jnp.allclose(pe[:B, :embed_dim], ref_eeg, atol=3e-2, rtol=3e-2)
    assert jnp.allclose(p1[:B, :embed_dim], ref_i1, atol=3e-2, rtol=3e-2)
    assert jnp.allclose(p2[:B, :embed_dim], ref_i2, atol=3e-2, rtol=3e-2)

    # Exercise the single-encoder helpers too.
    ee = get_eeg_embedding(prepared, eeg, embed_dim=embed_dim)
    ie = get_img_embedding(prepared, img1, embed_dim=embed_dim)
    jax.block_until_ready((ee, ie))
    assert jnp.allclose(ee, ref_eeg, atol=3e-2, rtol=3e-2)
    assert jnp.allclose(ie, ref_i1, atol=3e-2, rtol=3e-2)

    print("KERNEL_OK")
</pallas_src>

<mosaic_0001>
module attributes {stable_mosaic.version = 11 : i64} {
  func.func @_triplet_kernel(%arg0: memref<8x64xf32, #tpu.memory_space<vmem>>, %arg1: memref<8x1024xf32, #tpu.memory_space<vmem>>, %arg2: memref<8x1024xf32, #tpu.memory_space<vmem>>, %arg3: memref<64x128xbf16, #tpu.memory_space<vmem>>, %arg4: memref<1x128xf32, #tpu.memory_space<vmem>>, %arg5: memref<128x128xbf16, #tpu.memory_space<vmem>>, %arg6: memref<1x128xf32, #tpu.memory_space<vmem>>, %arg7: memref<1024x128xbf16, #tpu.memory_space<vmem>>, %arg8: memref<1x128xf32, #tpu.memory_space<vmem>>, %arg9: memref<128x128xbf16, #tpu.memory_space<vmem>>, %arg10: memref<1x128xf32, #tpu.memory_space<vmem>>, %arg11: memref<8x128xf32, #tpu.memory_space<vmem>>, %arg12: memref<8x128xf32, #tpu.memory_space<vmem>>, %arg13: memref<8x128xf32, #tpu.memory_space<vmem>>) attributes {dimension_semantics = [], scalar_prefetch = 0 : i64, scratch_operands = 0 : i64, tpu.core_type = #tpu.core_type<tc>} {
    %c0 = arith.constant 0 : index
    %c0_0 = arith.constant 0 : index
    %0 = vector.load %arg0[%c0, %c0_0] : memref<8x64xf32, #tpu.memory_space<vmem>>, vector<8x64xf32>
    %1 = arith.truncf %0 : vector<8x64xf32> to vector<8x64xbf16>
    %c0_1 = arith.constant 0 : index
    %c0_2 = arith.constant 0 : index
    %2 = vector.load %arg3[%c0_1, %c0_2] : memref<64x128xbf16, #tpu.memory_space<vmem>>, vector<64x128xbf16>
    %cst = arith.constant dense<0.000000e+00> : vector<8x128xf32>
    %3 = tpu.matmul %1, %2, %cst {dimension_numbers = #tpu.dot_dimension_numbers<[1], [0], [0], [1], [0, 0, 1, 1], [], []>} : vector<8x64xbf16>, vector<64x128xbf16>, vector<8x128xf32> -> vector<8x128xf32>
    %c0_3 = arith.constant 0 : index
    %c0_4 = arith.constant 0 : index
    %4 = vector.load %arg4[%c0_3, %c0_4] : memref<1x128xf32, #tpu.memory_space<vmem>>, vector<1x128xf32>
    %5 = vector.broadcast %4 : vector<1x128xf32> to vector<8x128xf32>
    %6 = arith.addf %3, %5 : vector<8x128xf32>
    %cst_5 = arith.constant 0.000000e+00 : f32
    %7 = vector.broadcast %cst_5 : f32 to vector<8x128xf32>
    %8 = arith.maximumf %6, %7 : vector<8x128xf32>
    %9 = arith.truncf %8 : vector<8x128xf32> to vector<8x128xbf16>
    %c0_6 = arith.constant 0 : index
    %c0_7 = arith.constant 0 : index
    %10 = vector.load %arg5[%c0_6, %c0_7] : memref<128x128xbf16, #tpu.memory_space<vmem>>, vector<128x128xbf16>
    %cst_8 = arith.constant dense<0.000000e+00> : vector<8x128xf32>
    %11 = tpu.matmul %9, %10, %cst_8 {dimension_numbers = #tpu.dot_dimension_numbers<[1], [0], [0], [1], [0, 0, 1, 1], [], []>} : vector<8x128xbf16>, vector<128x128xbf16>, vector<8x128xf32> -> vector<8x128xf32>
    %c0_9 = arith.constant 0 : index
    %c0_10 = arith.constant 0 : index
    %12 = vector.load %arg6[%c0_9, %c0_10] : memref<1x128xf32, #tpu.memory_space<vmem>>, vector<1x128xf32>
    %13 = vector.broadcast %12 : vector<1x128xf32> to vector<8x128xf32>
    %14 = arith.addf %11, %13 : vector<8x128xf32>
    %c0_11 = arith.constant 0 : index
    %c0_12 = arith.constant 0 : index
    %15 = vector.load %arg11[%c0_11, %c0_12] : memref<8x128xf32, #tpu.memory_space<vmem>>, vector<8x128xf32>
    tpu.vector_store %arg11[%c0_11, %c0_12], %14 {strides = array<i32>} : memref<8x128xf32, #tpu.memory_space<vmem>>, vector<8x128xf32>,
    %c0_13 = arith.constant 0 : index
    %c0_14 = arith.constant 0 : index
    %16 = vector.load %arg1[%c0_13, %c0_14] : memref<8x1024xf32, #tpu.memory_space<vmem>>, vector<8x1024xf32>
    %17 = arith.truncf %16 : vector<8x1024xf32> to vector<8x1024xbf16>
    %c0_15 = arith.constant 0 : index
    %c0_16 = arith.constant 0 : index
    %18 = vector.load %arg7[%c0_15, %c0_16] : memref<1024x128xbf16, #tpu.memory_space<vmem>>, vector<1024x128xbf16>
    %cst_17 = arith.constant dense<0.000000e+00> : vector<8x128xf32>
    %19 = tpu.matmul %17, %18, %cst_17 {dimension_numbers = #tpu.dot_dimension_numbers<[1], [0], [0], [1], [0, 0, 1, 1], [], []>} : vector<8x1024xbf16>, vector<1024x128xbf16>, vector<8x128xf32> -> vector<8x128xf32>
    %c0_18 = arith.constant 0 : index
    %c0_19 = arith.constant 0 : index
    %20 = vector.load %arg8[%c0_18, %c0_19] : memref<1x128xf32, #tpu.memory_space<vmem>>, vector<1x128xf32>
    %21 = vector.broadcast %20 : vector<1x128xf32> to vector<8x128xf32>
    %22 = arith.addf %19, %21 : vector<8x128xf32>
    %cst_20 = arith.constant 0.000000e+00 : f32
    %23 = vector.broadcast %cst_20 : f32 to vector<8x128xf32>
    %24 = arith.maximumf %22, %23 : vector<8x128xf32>
    %25 = arith.truncf %24 : vector<8x128xf32> to vector<8x128xbf16>
    %c0_21 = arith.constant 0 : index
    %c0_22 = arith.constant 0 : index
    %26 = vector.load %arg9[%c0_21, %c0_22] : memref<128x128xbf16, #tpu.memory_space<vmem>>, vector<128x128xbf16>
    %cst_23 = arith.constant dense<0.000000e+00> : vector<8x128xf32>
    %27 = tpu.matmul %25, %26, %cst_23 {dimension_numbers = #tpu.dot_dimension_numbers<[1], [0], [0], [1], [0, 0, 1, 1], [], []>} : vector<8x128xbf16>, vector<128x128xbf16>, vector<8x128xf32> -> vector<8x128xf32>
    %c0_24 = arith.constant 0 : index
    %c0_25 = arith.constant 0 : index
    %28 = vector.load %arg10[%c0_24, %c0_25] : memref<1x128xf32, #tpu.memory_space<vmem>>, vector<1x128xf32>
    %29 = vector.broadcast %28 : vector<1x128xf32> to vector<8x128xf32>
    %30 = arith.addf %27, %29 : vector<8x128xf32>
    %c0_26 = arith.constant 0 : index
    %c0_27 = arith.constant 0 : index
    %31 = vector.load %arg12[%c0_26, %c0_27] : memref<8x128xf32, #tpu.memory_space<vmem>>, vector<8x128xf32>
    tpu.vector_store %arg12[%c0_26, %c0_27], %30 {strides = array<i32>} : memref<8x128xf32, #tpu.memory_space<vmem>>, vector<8x128xf32>,
    %c0_28 = arith.constant 0 : index
    %c0_29 = arith.constant 0 : index
    %32 = vector.load %arg2[%c0_28, %c0_29] : memref<8x1024xf32, #tpu.memory_space<vmem>>, vector<8x1024xf32>
    %33 = arith.truncf %32 : vector<8x1024xf32> to vector<8x1024xbf16>
    %c0_30 = arith.constant 0 : index
    %c0_31 = arith.constant 0 : index
    %34 = vector.load %arg7[%c0_30, %c0_31] : memref<1024x128xbf16, #tpu.memory_space<vmem>>, vector<1024x128xbf16>
    %cst_32 = arith.constant dense<0.000000e+00> : vector<8x128xf32>
    %35 = tpu.matmul %33, %34, %cst_32 {dimension_numbers = #tpu.dot_dimension_numbers<[1], [0], [0], [1], [0, 0, 1, 1], [], []>} : vector<8x1024xbf16>, vector<1024x128xbf16>, vector<8x128xf32> -> vector<8x128xf32>
    %c0_33 = arith.constant 0 : index
    %c0_34 = arith.constant 0 : index
    %36 = vector.load %arg8[%c0_33, %c0_34] : memref<1x128xf32, #tpu.memory_space<vmem>>, vector<1x128xf32>
    %37 = vector.broadcast %36 : vector<1x128xf32> to vector<8x128xf32>
    %38 = arith.addf %35, %37 : vector<8x128xf32>
    %cst_35 = arith.constant 0.000000e+00 : f32
    %39 = vector.broadcast %cst_35 : f32 to vector<8x128xf32>
    %40 = arith.maximumf %38, %39 : vector<8x128xf32>
    %41 = arith.truncf %40 : vector<8x128xf32> to vector<8x128xbf16>
    %c0_36 = arith.constant 0 : index
    %c0_37 = arith.constant 0 : index
    %42 = vector.load %arg9[%c0_36, %c0_37] : memref<128x128xbf16, #tpu.memory_space<vmem>>, vector<128x128xbf16>
    %cst_38 = arith.constant dense<0.000000e+00> : vector<8x128xf32>
    %43 = tpu.matmul %41, %42, %cst_38 {dimension_numbers = #tpu.dot_dimension_numbers<[1], [0], [0], [1], [0, 0, 1, 1], [], []>} : vector<8x128xbf16>, vector<128x128xbf16>, vector<8x128xf32> -> vector<8x128xf32>
    %c0_39 = arith.constant 0 : index
    %c0_40 = arith.constant 0 : index
    %44 = vector.load %arg10[%c0_39, %c0_40] : memref<1x128xf32, #tpu.memory_space<vmem>>, vector<1x128xf32>
    %45 = vector.broadcast %44 : vector<1x128xf32> to vector<8x128xf32>
    %46 = arith.addf %43, %45 : vector<8x128xf32>
    %c0_41 = arith.constant 0 : index
    %c0_42 = arith.constant 0 : index
    %47 = vector.load %arg13[%c0_41, %c0_42] : memref<8x128xf32, #tpu.memory_space<vmem>>, vector<8x128xf32>
    tpu.vector_store %arg13[%c0_41, %c0_42], %46 {strides = array<i32>} : memref<8x128xf32, #tpu.memory_space<vmem>>, vector<8x128xf32>,
    return
  }
}

</mosaic_0001>

<llo_original>
// kernel: triplet_net_forward.1
$region0: #{triplet_net_forward.1}
  #allocation0 [shape = 'u32[]', space=smem, size = 0x4, offset = 0x4, fixed_abs, tag = 'smem constant byte address 0x4 - core index']
  #allocation1 [shape = 'u32[72,128]{1,0:T(1,128)}', space=vmem, size = 0x9000, scoped, tag = 'internal scratch']
  %s0 = inlined_call_operand.vmem [shape: f32[8,64], index: 0, kind: input, shape index: {}]
  %s1 = inlined_call_operand.vmem [shape: f32[8,1024], index: 1, kind: input, shape index: {}]
  %s2 = inlined_call_operand.vmem [shape: f32[8,1024], index: 2, kind: input, shape index: {}]
  %s3 = inlined_call_operand.vmem [shape: bf16[64,128], index: 3, kind: input, shape index: {}]
  %s4 = inlined_call_operand.vmem [shape: f32[1,128], index: 4, kind: input, shape index: {}]
  %s5 = inlined_call_operand.vmem [shape: bf16[128,128], index: 5, kind: input, shape index: {}]
  %s6 = inlined_call_operand.vmem [shape: f32[1,128], index: 6, kind: input, shape index: {}]
  %s7 = inlined_call_operand.hbm [shape: bf16[1024,128], index: 7, kind: input, shape index: {}]
  %s8 = inlined_call_operand.vmem [shape: f32[1,128], index: 8, kind: input, shape index: {}]
  %s9 = inlined_call_operand.vmem [shape: bf16[128,128], index: 9, kind: input, shape index: {}]
  %s10 = inlined_call_operand.vmem [shape: f32[1,128], index: 10, kind: input, shape index: {}]
  %s11 = inlined_call_operand.vmem [shape: f32[8,128], index: 11, kind: output, shape index: {0}]
  %s12 = inlined_call_operand.vmem [shape: f32[8,128], index: 12, kind: output, shape index: {1}]
  %s13 = inlined_call_operand.vmem [shape: f32[8,128], index: 13, kind: output, shape index: {2}]
  %14 = xla_tuple %s11, %s12, %s13
  %s15 = sld [smem:[#allocation0]]
  $region74: #{triplet_net_forward.1} parent=0
    _
  %s17 = ssub.s32 1, %s15
  %s18 = scalar_select 0, %s17, %s15
  $region1: #{triplet_net_forward.1} parent=0
    #allocation2 [shape = 'u8[262144]{0}', space=vmem, size = 0x40000, scoped, tag = 'input window, operand 7, single buffered']
    #allocation3 [shape = 's32[1]{0}', space=sflag, size = 0x4, scoped, tag = 'scoped memory for triplet_net_forward.1']
    %19 = vsyncpa [#allocation3], 0
    // Predicated region
    $region2: #{triplet_net_forward.1} parent=1 // pred_check
      _
    $region3: #{triplet_net_forward.1} parent=1 // pred_check_branch
      %21 = sbr.rel (0) target = $region5
    $region4: #{triplet_net_forward.1} parent=1 // pred_region
      _
    $region5: #{triplet_net_forward.1} parent=1 // pred_fallthru
      _
    // Predicated region
    $region6: #{triplet_net_forward.1} parent=1 // pred_check
      _
    $region7: #{triplet_net_forward.1} parent=1 // pred_check_branch
      %23 = sbr.rel (0) target = $region9
    $region8: #{triplet_net_forward.1} parent=1 // pred_region
      _
    $region9: #{triplet_net_forward.1} parent=1 // pred_fallthru
      _
    // Predicated region
    $region10: #{triplet_net_forward.1} parent=1 // pred_check
      _
    $region11: #{triplet_net_forward.1} parent=1 // pred_check_branch
      %25 = sbr.rel (0) target = $region13
    $region12: #{triplet_net_forward.1} parent=1 // pred_region
      _
    $region13: #{triplet_net_forward.1} parent=1 // pred_fallthru
      _
    // Predicated region
    $region14: #{triplet_net_forward.1} parent=1 // pred_check
      _
    $region15: #{triplet_net_forward.1} parent=1 // pred_check_branch
      %27 = sbr.rel (0) target = $region17
    $region16: #{triplet_net_forward.1} parent=1 // pred_region
      _
    $region17: #{triplet_net_forward.1} parent=1 // pred_fallthru
      _
    // Predicated region
    $region18: #{triplet_net_forward.1} parent=1 // pred_check
      _
    $region19: #{triplet_net_forward.1} parent=1 // pred_check_branch
      %29 = sbr.rel (0) target = $region21
    $region20: #{triplet_net_forward.1} parent=1 // pred_region
      _
    $region21: #{triplet_net_forward.1} parent=1 // pred_fallthru
      _
    // Predicated region
    $region22: #{triplet_net_forward.1} parent=1 // pred_check
      _
    $region23: #{triplet_net_forward.1} parent=1 // pred_check_branch
      %31 = sbr.rel (0) target = $region25
    $region24: #{triplet_net_forward.1} parent=1 // pred_region
      _
    $region25: #{triplet_net_forward.1} parent=1 // pred_fallthru
      _
    // Predicated region
    $region26: #{triplet_net_forward.1} parent=1 // pred_check
      _
    $region27: #{triplet_net_forward.1} parent=1 // pred_check_branch
      %33 = sbr.rel (0) target = $region29
    $region28: #{triplet_net_forward.1} parent=1 // pred_region
      _
    $region29: #{triplet_net_forward.1} parent=1 // pred_fallthru
      _
    // Predicated region
    $region30: #{triplet_net_forward.1} parent=1 // pred_check
      _
    $region31: #{triplet_net_forward.1} parent=1 // pred_check_branch
      %35 = sbr.rel (0) target = $region33
    $region32: #{triplet_net_forward.1} parent=1 // pred_region
      %37 = vsyncadd [#allocation3], 0
      %s38 = sshll.u32 %s7, 4
      %s39 = int_to_ptr.hbm [resolvable:$true] %s38
      %s40 = sshll.u32 [#allocation2], 4
      %s41 = int_to_ptr.vmem [resolvable:$true] %s40
      %46 = dma.hbm_to_vmem [thread:$0]  %s39, 8192, %s41, [#allocation3], 64, 64, 4
    $region33: #{triplet_net_forward.1} parent=1 // pred_fallthru
      _
    // Predicated region
    $region34: #{triplet_net_forward.1} parent=1 // pred_check
      _
    $region35: #{triplet_net_forward.1} parent=1 // pred_check_branch
      %48 = sbr.rel (0) target = $region37
    $region36: #{triplet_net_forward.1} parent=1 // pred_region
      _
    $region37: #{triplet_net_forward.1} parent=1 // pred_fallthru
      _
    // Predicated region
    $region38: #{triplet_net_forward.1} parent=1 // pred_check
      _
    $region39: #{triplet_net_forward.1} parent=1 // pred_check_branch
      %50 = sbr.rel (0) target = $region41
    $region40: #{triplet_net_forward.1} parent=1 // pred_region
      _
    $region41: #{triplet_net_forward.1} parent=1 // pred_fallthru
      _
    // Predicated region
    $region42: #{triplet_net_forward.1} parent=1 // pred_check
      _
    $region43: #{triplet_net_forward.1} parent=1 // pred_check_branch
      %52 = sbr.rel (0) target = $region45
    $region44: #{triplet_net_forward.1} parent=1 // pred_region
      _
    $region45: #{triplet_net_forward.1} parent=1 // pred_fallthru
      _
    // Predicated region
    $region46: #{triplet_net_forward.1} parent=1 // pred_check
      _
    $region47: #{triplet_net_forward.1} parent=1 // pred_check_branch
      %54 = sbr.rel (0) target = $region49
    $region48: #{triplet_net_forward.1} parent=1 // pred_region
      %56 = dma.done [#allocation3], 8192
    $region49: #{triplet_net_forward.1} parent=1 // pred_fallthru
      _
    %v58 = vld [vmem:[%s0] sm:$0xff]
    %v59 = vpack.c.bf16 %v58, %v58
    %v60 = vld [vmem:[%s3] sm:$0xf]
    %v61 = vld [vmem:[%s3 + $0x4] sm:$0xf]
    %v62 = vld [vmem:[%s3 + $0x8] sm:$0xf]
    %v63 = vld [vmem:[%s3 + $0xc] sm:$0xf]
    %v64 = vld [vmem:[%s3 + $0x10] sm:$0xf]
    %v65 = vld [vmem:[%s3 + $0x14] sm:$0xf]
    %v66 = vld [vmem:[%s3 + $0x18] sm:$0xf]
    %v67 = vld [vmem:[%s3 + $0x1c] sm:$0xf]
    %v68 = vld [vmem:[%s4] sm:$0x1]
    %v70 = vperm.slane %v68, 0
    %v80 = vunpack.c.l.b16 %v60
    %v81 = vunpack.c.l.b16 %v61
    %v82 = vunpack.c.l.b16 %v62
    %v83 = vunpack.c.l.b16 %v63
    %v84 = vunpack.c.l.b16 %v64
    %v85 = vunpack.c.l.b16 %v65
    %v86 = vunpack.c.l.b16 %v66
    %v87 = vunpack.c.l.b16 %v67
    %v88 = vpack.c.b16 %v81, %v80
    %v89 = vpack.c.b16 %v83, %v82
    %v90 = vpack.c.b16 %v85, %v84
    %v91 = vpack.c.b16 %v87, %v86
    %vm96 = vcmask 523264
    %v98 = vsel %vm96, %v59, 0
    %100 = vmatpush.bf16.msra.mxu0 0
    %101 = vmatpush.bf16.msra.mxu0 0
    %102 = vmatpush.bf16.msra.mxu0 0
    %103 = vmatpush.bf16.msra.mxu0 0
    %104 = vmatpush.bf16.msra.mxu0 %v91
    %105 = vmatpush.bf16.msra.mxu0 %v90
    %106 = vmatpush.bf16.msra.mxu0 %v89
    %107 = vmatpush.bf16.msra.mxu0 %v88
    %108 = vmatmul.bf16.gmra.mxu0 %v98
    %v109 = vpop.f32.mrf.mxu0
    %v110 = vadd.f32 %v70, %v109
    %v111 = vpop.f32.mrf.mxu0
    %112 = vdwg.mxu0
    %v113 = vmax.f32 %v110, 0.0
    %v114 = vpack.c.bf16 %v113, %v113
    %v115 = vld [vmem:[%s5] sm:$0xf]
    %v116 = vld [vmem:[%s5 + $0x4] sm:$0xf]
    %v117 = vld [vmem:[%s5 + $0x8] sm:$0xf]
    %v118 = vld [vmem:[%s5 + $0xc] sm:$0xf]
    %v119 = vld [vmem:[%s5 + $0x10] sm:$0xf]
    %v120 = vld [vmem:[%s5 + $0x14] sm:$0xf]
    %v121 = vld [vmem:[%s5 + $0x18] sm:$0xf]
    %v122 = vld [vmem:[%s5 + $0x1c] sm:$0xf]
    %v123 = vld [vmem:[%s5 + $0x20] sm:$0xf]
    %v124 = vld [vmem:[%s5 + $0x24] sm:$0xf]
    %v125 = vld [vmem:[%s5 + $0x28] sm:$0xf]
    %v126 = vld [vmem:[%s5 + $0x2c] sm:$0xf]
    %v127 = vld [vmem:[%s5 + $0x30] sm:$0xf]
    %v128 = vld [vmem:[%s5 + $0x34] sm:$0xf]
    %v129 = vld [vmem:[%s5 + $0x38] sm:$0xf]
    %v130 = vld [vmem:[%s5 + $0x3c] sm:$0xf]
    %v131 = vld [vmem:[%s6] sm:$0x1]
    %v133 = vperm.slane %v131, 0
    %v151 = vunpack.c.l.b16 %v115
    %v152 = vunpack.c.l.b16 %v116
    %v153 = vunpack.c.l.b16 %v117
    %v154 = vunpack.c.l.b16 %v118
    %v155 = vunpack.c.l.b16 %v119
    %v156 = vunpack.c.l.b16 %v120
    %v157 = vunpack.c.l.b16 %v121
    %v158 = vunpack.c.l.b16 %v122
    %v159 = vunpack.c.l.b16 %v123
    %v160 = vunpack.c.l.b16 %v124
    %v161 = vunpack.c.l.b16 %v125
    %v162 = vunpack.c.l.b16 %v126
    %v163 = vunpack.c.l.b16 %v127
    %v164 = vunpack.c.l.b16 %v128
    %v165 = vunpack.c.l.b16 %v129
    %v166 = vunpack.c.l.b16 %v130
    %v167 = vpack.c.b16 %v152, %v151
    %v168 = vpack.c.b16 %v154, %v153
    %v169 = vpack.c.b16 %v156, %v155
    %v170 = vpack.c.b16 %v158, %v157
    %v171 = vpack.c.b16 %v160, %v159
    %v172 = vpack.c.b16 %v162, %v161
    %v173 = vpack.c.b16 %v164, %v163
    %v174 = vpack.c.b16 %v166, %v165
    %183 = vmatpush.bf16.msra.mxu0 %v174
    %184 = vmatpush.bf16.msra.mxu0 %v173
    %185 = vmatpush.bf16.msra.mxu0 %v172
    %186 = vmatpush.bf16.msra.mxu0 %v171
    %187 = vmatpush.bf16.msra.mxu0 %v170
    %188 = vmatpush.bf16.msra.mxu0 %v169
    %189 = vmatpush.bf16.msra.mxu0 %v168
    %190 = vmatpush.bf16.msra.mxu0 %v167
    %191 = vmatmul.bf16.gmra.mxu0 %v114
    %v192 = vpop.f32.mrf.mxu0
    %v193 = vadd.f32 %v133, %v192
    %v194 = vpop.f32.mrf.mxu0
    %195 = vdwg.mxu0
    %196 = vst [vmem:[%s11] sm:$0xff] %v193
    %v197 = vld [vmem:[%s1] sm:$0xff]
    %v198 = vld [vmem:[%s1 + $0x8] sm:$0xff]
    %v199 = vld [vmem:[%s1 + $0x10] sm:$0xff]
    %v200 = vld [vmem:[%s1 + $0x18] sm:$0xff]
    %v201 = vld [vmem:[%s1 + $0x20] sm:$0xff]
    %v202 = vld [vmem:[%s1 + $0x28] sm:$0xff]
    %v203 = vld [vmem:[%s1 + $0x30] sm:$0xff]
    %v204 = vld [vmem:[%s1 + $0x38] sm:$0xff]
    %v205 = vpack.c.bf16 %v197, %v197
    %v206 = vpack.c.bf16 %v198, %v198
    %v207 = vpack.c.bf16 %v199, %v199
    %v208 = vpack.c.bf16 %v200, %v200
    %v209 = vpack.c.bf16 %v201, %v201
    %v210 = vpack.c.bf16 %v202, %v202
    %v211 = vpack.c.bf16 %v203, %v203
    %v212 = vpack.c.bf16 %v204, %v204
    %v213 = vld [vmem:[#allocation2] sm:$0xf]
    %v214 = vld [vmem:[#allocation2 + $0x4] sm:$0xf]
    %v215 = vld [vmem:[#allocation2 + $0x8] sm:$0xf]
    %v216 = vld [vmem:[#allocation2 + $0xc] sm:$0xf]
    %v217 = vld [vmem:[#allocation2 + $0x10] sm:$0xf]
    %v218 = vld [vmem:[#allocation2 + $0x14] sm:$0xf]
    %v219 = vld [vmem:[#allocation2 + $0x18] sm:$0xf]
    %v220 = vld [vmem:[#allocation2 + $0x1c] sm:$0xf]
    %v221 = vld [vmem:[#allocation2 + $0x20] sm:$0xf]
    %v222 = vld [vmem:[#allocation2 + $0x24] sm:$0xf]
    %v223 = vld [vmem:[#allocation2 + $0x28] sm:$0xf]
    %v224 = vld [vmem:[#allocation2 + $0x2c] sm:$0xf]
    %v225 = vld [vmem:[#allocation2 + $0x30] sm:$0xf]
    %v226 = vld [vmem:[#allocation2 + $0x34] sm:$0xf]
    %v227 = vld [vmem:[#allocation2 + $0x38] sm:$0xf]
    %v228 = vld [vmem:[#allocation2 + $0x3c] sm:$0xf]
    %v229 = vld [vmem:[#allocation2 + $0x40] sm:$0xf]
    %v230 = vld [vmem:[#allocation2 + $0x44] sm:$0xf]
    %v231 = vld [vmem:[#allocation2 + $0x48] sm:$0xf]
    %v232 = vld [vmem:[#allocation2 + $0x4c] sm:$0xf]
    %v233 = vld [vmem:[#allocation2 + $0x50] sm:$0xf]
    %v234 = vld [vmem:[#allocation2 + $0x54] sm:$0xf]
    %v235 = vld [vmem:[#allocation2 + $0x58] sm:$0xf]
    %v236 = vld [vmem:[#allocation2 + $0x5c] sm:$0xf]
    %v237 = vld [vmem:[#allocation2 + $0x60] sm:$0xf]
    %v238 = vld [vmem:[#allocation2 + $0x64] sm:$0xf]
    %v239 = vld [vmem:[#allocation2 + $0x68] sm:$0xf]
    %v240 = vld [vmem:[#allocation2 + $0x6c] sm:$0xf]
    %v241 = vld [vmem:[#allocation2 + $0x70] sm:$0xf]
    %v242 = vld [vmem:[#allocation2 + $0x74] sm:$0xf]
    %v243 = vld [vmem:[#allocation2 + $0x78] sm:$0xf]
    %v244 = vld [vmem:[#allocation2 + $0x7c] sm:$0xf]
    %v245 = vld [vmem:[#allocation2 + $0x80] sm:$0xf]
    %v246 = vld [vmem:[#allocation2 + $0x84] sm:$0xf]
    %v247 = vld [vmem:[#allocation2 + $0x88] sm:$0xf]
    %v248 = vld [vmem:[#allocation2 + $0x8c] sm:$0xf]
    %v249 = vld [vmem:[#allocation2 + $0x90] sm:$0xf]
    %v250 = vld [vmem:[#allocation2 + $0x94] sm:$0xf]
    %v251 = vld [vmem:[#allocation2 + $0x98] sm:$0xf]
    %v252 = vld [vmem:[#allocation2 + $0x9c] sm:$0xf]
    %v253 = vld [vmem:[#allocation2 + $0xa0] sm:$0xf]
    %v254 = vld [vmem:[#allocation2 + $0xa4] sm:$0xf]
    %v255 = vld [vmem:[#allocation2 + $0xa8] sm:$0xf]
    %v256 = vld [vmem:[#allocation2 + $0xac] sm:$0xf]
    %v257 = vld [vmem:[#allocation2 + $0xb0] sm:$0xf]
    %v258 = vld [vmem:[#allocation2 + $0xb4] sm:$0xf]
    %v259 = vld [vmem:[#allocation2 + $0xb8] sm:$0xf]
    %v260 = vld [vmem:[#allocation2 + $0xbc] sm:$0xf]
    %v261 = vld [vmem:[#allocation2 + $0xc0] sm:$0xf]
    %v262 = vld [vmem:[#allocation2 + $0xc4] sm:$0xf]
    %v263 = vld [vmem:[#allocation2 + $0xc8] sm:$0xf]
    %v264 = vld [vmem:[#allocation2 + $0xcc] sm:$0xf]
    %v265 = vld [vmem:[#allocation2 + $0xd0] sm:$0xf]
    %v266 = vld [vmem:[#allocation2 + $0xd4] sm:$0xf]
    %v267 = vld [vmem:[#allocation2 + $0xd8] sm:$0xf]
    %v268 = vld [vmem:[#allocation2 + $0xdc] sm:$0xf]
    %v269 = vld [vmem:[#allocation2 + $0xe0] sm:$0xf]
    %v270 = vld [vmem:[#allocation2 + $0xe4] sm:$0xf]
    %v271 = vld [vmem:[#allocation2 + $0xe8] sm:$0xf]
    %v272 = vld [vmem:[#allocation2 + $0xec] sm:$0xf]
    %v273 = vld [vmem:[#allocation2 + $0xf0] sm:$0xf]
    %v274 = vld [vmem:[#allocation2 + $0xf4] sm:$0xf]
    %v275 = vld [vmem:[#allocation2 + $0xf8] sm:$0xf]
    %v276 = vld [vmem:[#allocation2 + $0xfc] sm:$0xf]
    %v277 = vld [vmem:[#allocation2 + $0x100] sm:$0xf]
    %v278 = vld [vmem:[#allocation2 + $0x104] sm:$0xf]
    %v279 = vld [vmem:[#allocation2 + $0x108] sm:$0xf]
    %v280 = vld [vmem:[#allocation2 + $0x10c] sm:$0xf]
    %v281 = vld [vmem:[#allocation2 + $0x110] sm:$0xf]
    %v282 = vld [vmem:[#allocation2 + $0x114] sm:$0xf]
    %v283 = vld [vmem:[#allocation2 + $0x118] sm:$0xf]
    %v284 = vld [vmem:[#allocation2 + $0x11c] sm:$0xf]
    %v285 = vld [vmem:[#allocation2 + $0x120] sm:$0xf]
    %v286 = vld [vmem:[#allocation2 + $0x124] sm:$0xf]
    %v287 = vld [vmem:[#allocation2 + $0x128] sm:$0xf]
    %v288 = vld [vmem:[#allocation2 + $0x12c] sm:$0xf]
    %v289 = vld [vmem:[#allocation2 + $0x130] sm:$0xf]
    %v290 = vld [vmem:[#allocation2 + $0x134] sm:$0xf]
    %v291 = vld [vmem:[#allocation2 + $0x138] sm:$0xf]
    %v292 = vld [vmem:[#allocation2 + $0x13c] sm:$0xf]
    %v293 = vld [vmem:[#allocation2 + $0x140] sm:$0xf]
    %v294 = vld [vmem:[#allocation2 + $0x144] sm:$0xf]
    %v295 = vld [vmem:[#allocation2 + $0x148] sm:$0xf]
    %v296 = vld [vmem:[#allocation2 + $0x14c] sm:$0xf]
    %v297 = vld [vmem:[#allocation2 + $0x150] sm:$0xf]
    %v298 = vld [vmem:[#allocation2 + $0x154] sm:$0xf]
    %v299 = vld [vmem:[#allocation2 + $0x158] sm:$0xf]
    %v300 = vld [vmem:[#allocation2 + $0x15c] sm:$0xf]
    %v301 = vld [vmem:[#allocation2 + $0x160] sm:$0xf]
    %v302 = vld [vmem:[#allocation2 + $0x164] sm:$0xf]
    %v303 = vld [vmem:[#allocation2 + $0x168] sm:$0xf]
    %v304 = vld [vmem:[#allocation2 + $0x16c] sm:$0xf]
    %v305 = vld [vmem:[#allocation2 + $0x170] sm:$0xf]
    %v306 = vld [vmem:[#allocation2 + $0x174] sm:$0xf]
    %v307 = vld [vmem:[#allocation2 + $0x178] sm:$0xf]
    %v308 = vld [vmem:[#allocation2 + $0x17c] sm:$0xf]
    %v309 = vld [vmem:[#allocation2 + $0x180] sm:$0xf]
    %v310 = vld [vmem:[#allocation2 + $0x184] sm:$0xf]
    %v311 = vld [vmem:[#allocation2 + $0x188] sm:$0xf]
    %v312 = vld [vmem:[#allocation2 + $0x18c] sm:$0xf]
    %v313 = vld [vmem:[#allocation2 + $0x190] sm:$0xf]
    %v314 = vld [vmem:[#allocation2 + $0x194] sm:$0xf]
    %v315 = vld [vmem:[#allocation2 + $0x198] sm:$0xf]
    %v316 = vld [vmem:[#allocation2 + $0x19c] sm:$0xf]
    %v317 = vld [vmem:[#allocation2 + $0x1a0] sm:$0xf]
    %v318 = vld [vmem:[#allocation2 + $0x1a4] sm:$0xf]
    %v319 = vld [vmem:[#allocation2 + $0x1a8] sm:$0xf]
    %v320 = vld [vmem:[#allocation2 + $0x1ac] sm:$0xf]
    %v321 = vld [vmem:[#allocation2 + $0x1b0] sm:$0xf]
    %v322 = vld [vmem:[#allocation2 + $0x1b4] sm:$0xf]
    %v323 = vld [vmem:[#allocation2 + $0x1b8] sm:$0xf]
    %v324 = vld [vmem:[#allocation2 + $0x1bc] sm:$0xf]
    %v325 = vld [vmem:[#allocation2 + $0x1c0] sm:$0xf]
    %v326 = vld [vmem:[#allocation2 + $0x1c4] sm:$0xf]
    %v327 = vld [vmem:[#allocation2 + $0x1c8] sm:$0xf]
    %v328 = vld [vmem:[#allocation2 + $0x1cc] sm:$0xf]
    %v329 = vld [vmem:[#allocation2 + $0x1d0] sm:$0xf]
    %v330 = vld [vmem:[#allocation2 + $0x1d4] sm:$0xf]
    %v331 = vld [vmem:[#allocation2 + $0x1d8] sm:$0xf]
    %v332 = vld [vmem:[#allocation2 + $0x1dc] sm:$0xf]
    %v333 = vld [vmem:[#allocation2 + $0x1e0] sm:$0xf]
    %v334 = vld [vmem:[#allocation2 + $0x1e4] sm:$0xf]
    %v335 = vld [vmem:[#allocation2 + $0x1e8] sm:$0xf]
    %v336 = vld [vmem:[#allocation2 + $0x1ec] sm:$0xf]
    %v337 = vld [vmem:[#allocation2 + $0x1f0] sm:$0xf]
    %v338 = vld [vmem:[#allocation2 + $0x1f4] sm:$0xf]
    %v339 = vld [vmem:[#allocation2 + $0x1f8] sm:$0xf]
    %v340 = vld [vmem:[#allocation2 + $0x1fc] sm:$0xf]
    %v341 = vld [vmem:[%s8] sm:$0x1]
    %v343 = vperm.slane %v341, 0
    %v473 = vunpack.c.l.b16 %v213
    %v474 = vunpack.c.l.b16 %v214
    %v475 = vunpack.c.l.b16 %v215
    %v476 = vunpack.c.l.b16 %v216
    %v477 = vunpack.c.l.b16 %v217
    %v478 = vunpack.c.l.b16 %v218
    %v479 = vunpack.c.l.b16 %v219
    %v480 = vunpack.c.l.b16 %v220
    %v481 = vunpack.c.l.b16 %v221
    %v482 = vunpack.c.l.b16 %v222
    %v483 = vunpack.c.l.b16 %v223
    %v484 = vunpack.c.l.b16 %v224
    %v485 = vunpack.c.l.b16 %v225
    %v486 = vunpack.c.l.b16 %v226
    %v487 = vunpack.c.l.b16 %v227
    %v488 = vunpack.c.l.b16 %v228
    %v489 = vunpack.c.l.b16 %v229
    %v490 = vunpack.c.l.b16 %v230
    %v491 = vunpack.c.l.b16 %v231
    %v492 = vunpack.c.l.b16 %v232
    %v493 = vunpack.c.l.b16 %v233
    %v494 = vunpack.c.l.b16 %v234
    %v495 = vunpack.c.l.b16 %v235
    %v496 = vunpack.c.l.b16 %v236
    %v497 = vunpack.c.l.b16 %v237
    %v498 = vunpack.c.l.b16 %v238
    %v499 = vunpack.c.l.b16 %v239
    %v500 = vunpack.c.l.b16 %v240
    %v501 = vunpack.c.l.b16 %v241
    %v502 = vunpack.c.l.b16 %v242
    %v503 = vunpack.c.l.b16 %v243
    %v504 = vunpack.c.l.b16 %v244
    %v505 = vunpack.c.l.b16 %v245
    %v506 = vunpack.c.l.b16 %v246
    %v507 = vunpack.c.l.b16 %v247
    %v508 = vunpack.c.l.b16 %v248
    %v509 = vunpack.c.l.b16 %v249
    %v510 = vunpack.c.l.b16 %v250
    %v511 = vunpack.c.l.b16 %v251
    %v512 = vunpack.c.l.b16 %v252
    %v513 = vunpack.c.l.b16 %v253
    %v514 = vunpack.c.l.b16 %v254
    %v515 = vunpack.c.l.b16 %v255
    %v516 = vunpack.c.l.b16 %v256
    %v517 = vunpack.c.l.b16 %v257
    %v518 = vunpack.c.l.b16 %v258
    %v519 = vunpack.c.l.b16 %v259
    %v520 = vunpack.c.l.b16 %v260
    %v521 = vunpack.c.l.b16 %v261
    %v522 = vunpack.c.l.b16 %v262
    %v523 = vunpack.c.l.b16 %v263
    %v524 = vunpack.c.l.b16 %v264
    %v525 = vunpack.c.l.b16 %v265
    %v526 = vunpack.c.l.b16 %v266
    %v527 = vunpack.c.l.b16 %v267
    %v528 = vunpack.c.l.b16 %v268
    %v529 = vunpack.c.l.b16 %v269
    %v530 = vunpack.c.l.b16 %v270
    %v531 = vunpack.c.l.b16 %v271
    %v532 = vunpack.c.l.b16 %v272
    %v533 = vunpack.c.l.b16 %v273
    %v534 = vunpack.c.l.b16 %v274
    %v535 = vunpack.c.l.b16 %v275
    %v536 = vunpack.c.l.b16 %v276
    %v537 = vunpack.c.l.b16 %v277
    %v538 = vunpack.c.l.b16 %v278
    %v539 = vunpack.c.l.b16 %v279
    %v540 = vunpack.c.l.b16 %v280
    %v541 = vunpack.c.l.b16 %v281
    %v542 = vunpack.c.l.b16 %v282
    %v543 = vunpack.c.l.b16 %v283
    %v544 = vunpack.c.l.b16 %v284
    %v545 = vunpack.c.l.b16 %v285
    %v546 = vunpack.c.l.b16 %v286
    %v547 = vunpack.c.l.b16 %v287
    %v548 = vunpack.c.l.b16 %v288
    %v549 = vunpack.c.l.b16 %v289
    %v550 = vunpack.c.l.b16 %v290
    %v551 = vunpack.c.l.b16 %v291
    %v552 = vunpack.c.l.b16 %v292
    %v553 = vunpack.c.l.b16 %v293
    %v554 = vunpack.c.l.b16 %v294
    %v555 = vunpack.c.l.b16 %v295
    %v556 = vunpack.c.l.b16 %v296
    %v557 = vunpack.c.l.b16 %v297
    %v558 = vunpack.c.l.b16 %v298
    %v559 = vunpack.c.l.b16 %v299
    %v560 = vunpack.c.l.b16 %v300
    %v561 = vunpack.c.l.b16 %v301
    %v562 = vunpack.c.l.b16 %v302
    %v563 = vunpack.c.l.b16 %v303
    %v564 = vunpack.c.l.b16 %v304
    %v565 = vunpack.c.l.b16 %v305
    %v566 = vunpack.c.l.b16 %v306
    %v567 = vunpack.c.l.b16 %v307
    %v568 = vunpack.c.l.b16 %v308
    %v569 = vunpack.c.l.b16 %v309
    %v570 = vunpack.c.l.b16 %v310
    %v571 = vunpack.c.l.b16 %v311
    %v572 = vunpack.c.l.b16 %v312
    %v573 = vunpack.c.l.b16 %v313
    %v574 = vunpack.c.l.b16 %v314
    %v575 = vunpack.c.l.b16 %v315
    %v576 = vunpack.c.l.b16 %v316
    %v577 = vunpack.c.l.b16 %v317
    %v578 = vunpack.c.l.b16 %v318
    %v579 = vunpack.c.l.b16 %v319
    %v580 = vunpack.c.l.b16 %v320
    %v581 = vunpack.c.l.b16 %v321
    %v582 = vunpack.c.l.b16 %v322
    %v583 = vunpack.c.l.b16 %v323
    %v584 = vunpack.c.l.b16 %v324
    %v585 = vunpack.c.l.b16 %v325
    %v586 = vunpack.c.l.b16 %v326
    %v587 = vunpack.c.l.b16 %v327
    %v588 = vunpack.c.l.b16 %v328
    %v589 = vunpack.c.l.b16 %v329
    %v590 = vunpack.c.l.b16 %v330
    %v591 = vunpack.c.l.b16 %v331
    %v592 = vunpack.c.l.b16 %v332
    %v593 = vunpack.c.l.b16 %v333
    %v594 = vunpack.c.l.b16 %v334
    %v595 = vunpack.c.l.b16 %v335
    %v596 = vunpack.c.l.b16 %v336
    %v597 = vunpack.c.l.b16 %v337
    %v598 = vunpack.c.l.b16 %v338
    %v599 = vunpack.c.l.b16 %v339
    %v600 = vunpack.c.l.b16 %v340
    %v601 = vpack.c.b16 %v474, %v473
    %v602 = vpack.c.b16 %v476, %v475
    %v603 = vpack.c.b16 %v478, %v477
    %v604 = vpack.c.b16 %v480, %v479
    %v605 = vpack.c.b16 %v482, %v481
    %v606 = vpack.c.b16 %v484, %v483
    %v607 = vpack.c.b16 %v486, %v485
    %v608 = vpack.c.b16 %v488, %v487
    %v609 = vpack.c.b16 %v490, %v489
    %v610 = vpack.c.b16 %v492, %v491
    %v611 = vpack.c.b16 %v494, %v493
    %v612 = vpack.c.b16 %v496, %v495
    %v613 = vpack.c.b16 %v498, %v497
    %v614 = vpack.c.b16 %v500, %v499
    %v615 = vpack.c.b16 %v502, %v501
    %v616 = vpack.c.b16 %v504, %v503
    %v617 = vpack.c.b16 %v506, %v505
    %v618 = vpack.c.b16 %v508, %v507
    %v619 = vpack.c.b16 %v510, %v509
    %v620 = vpack.c.b16 %v512, %v511
    %v621 = vpack.c.b16 %v514, %v513
    %v622 = vpack.c.b16 %v516, %v515
    %v623 = vpack.c.b16 %v518, %v517
    %v624 = vpack.c.b16 %v520, %v519
    %v625 = vpack.c.b16 %v522, %v521
    %v626 = vpack.c.b16 %v524, %v523
    %v627 = vpack.c.b16 %v526, %v525
    %v628 = vpack.c.b16 %v528, %v527
    %v629 = vpack.c.b16 %v530, %v529
    %v630 = vpack.c.b16 %v532, %v531
    %v631 = vpack.c.b16 %v534, %v533
    %v632 = vpack.c.b16 %v536, %v535
    %v633 = vpack.c.b16 %v538, %v537
    %v634 = vpack.c.b16 %v540, %v539
    %v635 = vpack.c.b16 %v542, %v541
    %v636 = vpack.c.b16 %v544, %v543
    %v637 = vpack.c.b16 %v546, %v545
    %v638 = vpack.c.b16 %v548, %v547
    %v639 = vpack.c.b16 %v550, %v549
    %v640 = vpack.c.b16 %v552, %v551
    %v641 = vpack.c.b16 %v554, %v553
    %v642 = vpack.c.b16 %v556, %v555
    %v643 = vpack.c.b16 %v558, %v557
    %v644 = vpack.c.b16 %v560, %v559
    %v645 = vpack.c.b16 %v562, %v561
    %v646 = vpack.c.b16 %v564, %v563
    %v647 = vpack.c.b16 %v566, %v565
    %v648 = vpack.c.b16 %v568, %v567
    %v649 = vpack.c.b16 %v570, %v569
    %v650 = vpack.c.b16 %v572, %v571
    %v651 = vpack.c.b16 %v574, %v573
    %v652 = vpack.c.b16 %v576, %v575
    %v653 = vpack.c.b16 %v578, %v577
    %v654 = vpack.c.b16 %v580, %v579
    %v655 = vpack.c.b16 %v582, %v581
    %v656 = vpack.c.b16 %v584, %v583
    %v657 = vpack.c.b16 %v586, %v585
    %v658 = vpack.c.b16 %v588, %v587
    %v659 = vpack.c.b16 %v590, %v589
    %v660 = vpack.c.b16 %v592, %v591
    %v661 = vpack.c.b16 %v594, %v593
    %v662 = vpack.c.b16 %v596, %v595
    %v663 = vpack.c.b16 %v598, %v597
    %v664 = vpack.c.b16 %v600, %v599
    %729 = vmatpush.bf16.msra.mxu0 %v608
    %730 = vmatpush.bf16.msra.mxu0 %v607
    %731 = vmatpush.bf16.msra.mxu0 %v606
    %732 = vmatpush.bf16.msra.mxu0 %v605
    %733 = vmatpush.bf16.msra.mxu0 %v604
    %734 = vmatpush.bf16.msra.mxu0 %v603
    %735 = vmatpush.bf16.msra.mxu0 %v602
    %736 = vmatpush.bf16.msra.mxu0 %v601
    %737 = vmatmul.bf16.gmra.mxu0 %v205
    %v738 = vpop.f32.mrf.mxu0
    %v739 = vadd.f32 %v343, %v738
    %v740 = vpop.f32.mrf.mxu0
    %741 = vdwg.mxu0
    %742 = vmatpush.bf16.msra.mxu0 %v616
    %743 = vmatpush.bf16.msra.mxu0 %v615
    %744 = vmatpush.bf16.msra.mxu0 %v614
    %745 = vmatpush.bf16.msra.mxu0 %v613
    %746 = vmatpush.bf16.msra.mxu0 %v612
    %747 = vmatpush.bf16.msra.mxu0 %v611
    %748 = vmatpush.bf16.msra.mxu0 %v610
    %749 = vmatpush.bf16.msra.mxu0 %v609
    %750 = vmatmul.bf16.gmra.mxu0 %v206
    %v751 = vpop.f32.mrf.mxu0
    %v752 = vadd.f32 %v739, %v751
    %v753 = vpop.f32.mrf.mxu0
    %754 = vdwg.mxu0
    %755 = vmatpush.bf16.msra.mxu0 %v624
    %756 = vmatpush.bf16.msra.mxu0 %v623
    %757 = vmatpush.bf16.msra.mxu0 %v622
    %758 = vmatpush.bf16.msra.mxu0 %v621
    %759 = vmatpush.bf16.msra.mxu0 %v620
    %760 = vmatpush.bf16.msra.mxu0 %v619
    %761 = vmatpush.bf16.msra.mxu0 %v618
    %762 = vmatpush.bf16.msra.mxu0 %v617
    %763 = vmatmul.bf16.gmra.mxu0 %v207
    %v764 = vpop.f32.mrf.mxu0
    %v765 = vadd.f32 %v752, %v764
    %v766 = vpop.f32.mrf.mxu0
    %767 = vdwg.mxu0
    %768 = vmatpush.bf16.msra.mxu0 %v632
    %769 = vmatpush.bf16.msra.mxu0 %v631
    %770 = vmatpush.bf16.msra.mxu0 %v630
    %771 = vmatpush.bf16.msra.mxu0 %v629
    %772 = vmatpush.bf16.msra.mxu0 %v628
    %773 = vmatpush.bf16.msra.mxu0 %v627
    %774 = vmatpush.bf16.msra.mxu0 %v626
    %775 = vmatpush.bf16.msra.mxu0 %v625
    %776 = vmatmul.bf16.gmra.mxu0 %v208
    %v777 = vpop.f32.mrf.mxu0
    %v778 = vadd.f32 %v765, %v777
    %v779 = vpop.f32.mrf.mxu0
    %780 = vdwg.mxu0
    %781 = vmatpush.bf16.msra.mxu0 %v640
    %782 = vmatpush.bf16.msra.mxu0 %v639
    %783 = vmatpush.bf16.msra.mxu0 %v638
    %784 = vmatpush.bf16.msra.mxu0 %v637
    %785 = vmatpush.bf16.msra.mxu0 %v636
    %786 = vmatpush.bf16.msra.mxu0 %v635
    %787 = vmatpush.bf16.msra.mxu0 %v634
    %788 = vmatpush.bf16.msra.mxu0 %v633
    %789 = vmatmul.bf16.gmra.mxu0 %v209
    %v790 = vpop.f32.mrf.mxu0
    %v791 = vadd.f32 %v778, %v790
    %v792 = vpop.f32.mrf.mxu0
    %793 = vdwg.mxu0
    %794 = vmatpush.bf16.msra.mxu0 %v648
    %795 = vmatpush.bf16.msra.mxu0 %v647
    %796 = vmatpush.bf16.msra.mxu0 %v646
    %797 = vmatpush.bf16.msra.mxu0 %v645
    %798 = vmatpush.bf16.msra.mxu0 %v644
    %799 = vmatpush.bf16.msra.mxu0 %v643
    %800 = vmatpush.bf16.msra.mxu0 %v642
    %801 = vmatpush.bf16.msra.mxu0 %v641
    %802 = vmatmul.bf16.gmra.mxu0 %v210
    %v803 = vpop.f32.mrf.mxu0
    %v804 = vadd.f32 %v791, %v803
    %v805 = vpop.f32.mrf.mxu0
    %806 = vdwg.mxu0
    %807 = vmatpush.bf16.msra.mxu0 %v656
    %808 = vmatpush.bf16.msra.mxu0 %v655
    %809 = vmatpush.bf16.msra.mxu0 %v654
    %810 = vmatpush.bf16.msra.mxu0 %v653
    %811 = vmatpush.bf16.msra.mxu0 %v652
    %812 = vmatpush.bf16.msra.mxu0 %v651
    %813 = vmatpush.bf16.msra.mxu0 %v650
    %814 = vmatpush.bf16.msra.mxu0 %v649
    %815 = vmatmul.bf16.gmra.mxu0 %v211
    %v816 = vpop.f32.mrf.mxu0
    %v817 = vadd.f32 %v804, %v816
    %v818 = vpop.f32.mrf.mxu0
    %819 = vdwg.mxu0
    %820 = vmatpush.bf16.msra.mxu0 %v664
    %821 = vmatpush.bf16.msra.mxu0 %v663
    %822 = vmatpush.bf16.msra.mxu0 %v662
    %823 = vmatpush.bf16.msra.mxu0 %v661
    %824 = vmatpush.bf16.msra.mxu0 %v660
    %825 = vmatpush.bf16.msra.mxu0 %v659
    %826 = vmatpush.bf16.msra.mxu0 %v658
    %827 = vmatpush.bf16.msra.mxu0 %v657
    %828 = vmatmul.bf16.gmra.mxu0 %v212
    %v829 = vpop.f32.mrf.mxu0
    %v830 = vadd.f32 %v817, %v829
    %v831 = vpop.f32.mrf.mxu0
    %832 = vdwg.mxu0
    %v833 = vmax.f32 %v830, 0.0
    %v834 = vpack.c.bf16 %v833, %v833
    %v835 = vld [vmem:[%s9] sm:$0xf]
    %v836 = vld [vmem:[%s9 + $0x4] sm:$0xf]
    %v837 = vld [vmem:[%s9 + $0x8] sm:$0xf]
    %v838 = vld [vmem:[%s9 + $0xc] sm:$0xf]
    %v839 = vld [vmem:[%s9 + $0x10] sm:$0xf]
    %v840 = vld [vmem:[%s9 + $0x14] sm:$0xf]
    %v841 = vld [vmem:[%s9 + $0x18] sm:$0xf]
    %v842 = vld [vmem:[%s9 + $0x1c] sm:$0xf]
    %v843 = vld [vmem:[%s9 + $0x20] sm:$0xf]
    %v844 = vld [vmem:[%s9 + $0x24] sm:$0xf]
    %v845 = vld [vmem:[%s9 + $0x28] sm:$0xf]
    %v846 = vld [vmem:[%s9 + $0x2c] sm:$0xf]
    %v847 = vld [vmem:[%s9 + $0x30] sm:$0xf]
    %v848 = vld [vmem:[%s9 + $0x34] sm:$0xf]
    %v849 = vld [vmem:[%s9 + $0x38] sm:$0xf]
    %v850 = vld [vmem:[%s9 + $0x3c] sm:$0xf]
    %v851 = vld [vmem:[%s10] sm:$0x1]
    %v853 = vperm.slane %v851, 0
    %v871 = vunpack.c.l.b16 %v835
    %v872 = vunpack.c.l.b16 %v836
    %v873 = vunpack.c.l.b16 %v837
    %v874 = vunpack.c.l.b16 %v838
    %v875 = vunpack.c.l.b16 %v839
    %v876 = vunpack.c.l.b16 %v840
    %v877 = vunpack.c.l.b16 %v841
    %v878 = vunpack.c.l.b16 %v842
    %v879 = vunpack.c.l.b16 %v843
    %v880 = vunpack.c.l.b16 %v844
    %v881 = vunpack.c.l.b16 %v845
    %v882 = vunpack.c.l.b16 %v846
    %v883 = vunpack.c.l.b16 %v847
    %v884 = vunpack.c.l.b16 %v848
    %v885 = vunpack.c.l.b16 %v849
    %v886 = vunpack.c.l.b16 %v850
    %v887 = vpack.c.b16 %v872, %v871
    %v888 = vpack.c.b16 %v874, %v873
    %v889 = vpack.c.b16 %v876, %v875
    %v890 = vpack.c.b16 %v878, %v877
    %v891 = vpack.c.b16 %v880, %v879
    %v892 = vpack.c.b16 %v882, %v881
    %v893 = vpack.c.b16 %v884, %v883
    %v894 = vpack.c.b16 %v886, %v885
    %903 = vmatpush.bf16.msra.mxu0 %v894
    %904 = vmatpush.bf16.msra.mxu0 %v893
    %905 = vmatpush.bf16.msra.mxu0 %v892
    %906 = vmatpush.bf16.msra.mxu0 %v891
    %907 = vmatpush.bf16.msra.mxu0 %v890
    %908 = vmatpush.bf16.msra.mxu0 %v889
    %909 = vmatpush.bf16.msra.mxu0 %v888
    %910 = vmatpush.bf16.msra.mxu0 %v887
    %911 = vmatmul.bf16.gmra.mxu0 %v834
    %v912 = vpop.f32.mrf.mxu0
    %v913 = vadd.f32 %v853, %v912
    %v914 = vpop.f32.mrf.mxu0
    %915 = vdwg.mxu0
    %916 = vst [vmem:[%s12] sm:$0xff] %v913
    %v917 = vld [vmem:[%s2] sm:$0xff]
    %v918 = vld [vmem:[%s2 + $0x8] sm:$0xff]
    %v919 = vld [vmem:[%s2 + $0x10] sm:$0xff]
    %v920 = vld [vmem:[%s2 + $0x18] sm:$0xff]
    %v921 = vld [vmem:[%s2 + $0x20] sm:$0xff]
    %v922 = vld [vmem:[%s2 + $0x28] sm:$0xff]
    %v923 = vld [vmem:[%s2 + $0x30] sm:$0xff]
    %v924 = vld [vmem:[%s2 + $0x38] sm:$0xff]
    %v925 = vpack.c.bf16 %v917, %v917
    %v926 = vpack.c.bf16 %v918, %v918
    %v927 = vpack.c.bf16 %v919, %v919
    %v928 = vpack.c.bf16 %v920, %v920
    %v929 = vpack.c.bf16 %v921, %v921
    %v930 = vpack.c.bf16 %v922, %v922
    %v931 = vpack.c.bf16 %v923, %v923
    %v932 = vpack.c.bf16 %v924, %v924
    %v933 = vld [vmem:[#allocation2] sm:$0xf]
    %v934 = vld [vmem:[#allocation2 + $0x4] sm:$0xf]
    %v935 = vld [vmem:[#allocation2 + $0x8] sm:$0xf]
    %v936 = vld [vmem:[#allocation2 + $0xc] sm:$0xf]
    %v937 = vld [vmem:[#allocation2 + $0x10] sm:$0xf]
    %v938 = vld [vmem:[#allocation2 + $0x14] sm:$0xf]
    %v939 = vld [vmem:[#allocation2 + $0x18] sm:$0xf]
    %v940 = vld [vmem:[#allocation2 + $0x1c] sm:$0xf]
    %v941 = vld [vmem:[#allocation2 + $0x20] sm:$0xf]
    %v942 = vld [vmem:[#allocation2 + $0x24] sm:$0xf]
    %v943 = vld [vmem:[#allocation2 + $0x28] sm:$0xf]
    %v944 = vld [vmem:[#allocation2 + $0x2c] sm:$0xf]
    %v945 = vld [vmem:[#allocation2 + $0x30] sm:$0xf]
    %v946 = vld [vmem:[#allocation2 + $0x34] sm:$0xf]
    %v947 = vld [vmem:[#allocation2 + $0x38] sm:$0xf]
    %v948 = vld [vmem:[#allocation2 + $0x3c] sm:$0xf]
    %v949 = vld [vmem:[#allocation2 + $0x40] sm:$0xf]
    %v950 = vld [vmem:[#allocation2 + $0x44] sm:$0xf]
    %v951 = vld [vmem:[#allocation2 + $0x48] sm:$0xf]
    %v952 = vld [vmem:[#allocation2 + $0x4c] sm:$0xf]
    %v953 = vld [vmem:[#allocation2 + $0x50] sm:$0xf]
    %v954 = vld [vmem:[#allocation2 + $0x54] sm:$0xf]
    %v955 = vld [vmem:[#allocation2 + $0x58] sm:$0xf]
    %v956 = vld [vmem:[#allocation2 + $0x5c] sm:$0xf]
    %v957 = vld [vmem:[#allocation2 + $0x60] sm:$0xf]
    %v958 = vld [vmem:[#allocation2 + $0x64] sm:$0xf]
    %v959 = vld [vmem:[#allocation2 + $0x68] sm:$0xf]
    %v960 = vld [vmem:[#allocation2 + $0x6c] sm:$0xf]
    %v961 = vld [vmem:[#allocation2 + $0x70] sm:$0xf]
    %v962 = vld [vmem:[#allocation2 + $0x74] sm:$0xf]
    %v963 = vld [vmem:[#allocation2 + $0x78] sm:$0xf]
    %v964 = vld [vmem:[#allocation2 + $0x7c] sm:$0xf]
    %v965 = vld [vmem:[#allocation2 + $0x80] sm:$0xf]
    %v966 = vld [vmem:[#allocation2 + $0x84] sm:$0xf]
    %v967 = vld [vmem:[#allocation2 + $0x88] sm:$0xf]
    %v968 = vld [vmem:[#allocation2 + $0x8c] sm:$0xf]
    %v969 = vld [vmem:[#allocation2 + $0x90] sm:$0xf]
    %v970 = vld [vmem:[#allocation2 + $0x94] sm:$0xf]
    %v971 = vld [vmem:[#allocation2 + $0x98] sm:$0xf]
    %v972 = vld [vmem:[#allocation2 + $0x9c] sm:$0xf]
    %v973 = vld [vmem:[#allocation2 + $0xa0] sm:$0xf]
    %v974 = vld [vmem:[#allocation2 + $0xa4] sm:$0xf]
    %v975 = vld [vmem:[#allocation2 + $0xa8] sm:$0xf]
    %v976 = vld [vmem:[#allocation2 + $0xac] sm:$0xf]
    %v977 = vld [vmem:[#allocation2 + $0xb0] sm:$0xf]
    %v978 = vld [vmem:[#allocation2 + $0xb4] sm:$0xf]
    %v979 = vld [vmem:[#allocation2 + $0xb8] sm:$0xf]
    %v980 = vld [vmem:[#allocation2 + $0xbc] sm:$0xf]
    %v981 = vld [vmem:[#allocation2 + $0xc0] sm:$0xf]
    %v982 = vld [vmem:[#allocation2 + $0xc4] sm:$0xf]
    %v983 = vld [vmem:[#allocation2 + $0xc8] sm:$0xf]
    %v984 = vld [vmem:[#allocation2 + $0xcc] sm:$0xf]
    %v985 = vld [vmem:[#allocation2 + $0xd0] sm:$0xf]
    %v986 = vld [vmem:[#allocation2 + $0xd4] sm:$0xf]
    %v987 = vld [vmem:[#allocation2 + $0xd8] sm:$0xf]
    %v988 = vld [vmem:[#allocation2 + $0xdc] sm:$0xf]
    %v989 = vld [vmem:[#allocation2 + $0xe0] sm:$0xf]
    %v990 = vld [vmem:[#allocation2 + $0xe4] sm:$0xf]
    %v991 = vld [vmem:[#allocation2 + $0xe8] sm:$0xf]
    %v992 = vld [vmem:[#allocation2 + $0xec] sm:$0xf]
    %v993 = vld [vmem:[#allocation2 + $0xf0] sm:$0xf]
    %v994 = vld [vmem:[#allocation2 + $0xf4] sm:$0xf]
    %v995 = vld [vmem:[#allocation2 + $0xf8] sm:$0xf]
    %v996 = vld [vmem:[#allocation2 + $0xfc] sm:$0xf]
    %v997 = vld [vmem:[#allocation2 + $0x100] sm:$0xf]
    %v998 = vld [vmem:[#allocation2 + $0x104] sm:$0xf]
    %v999 = vld [vmem:[#allocation2 + $0x108] sm:$0xf]
    %v1000 = vld [vmem:[#allocation2 + $0x10c] sm:$0xf]
    %v1001 = vld [vmem:[#allocation2 + $0x110] sm:$0xf]
    %v1002 = vld [vmem:[#allocation2 + $0x114] sm:$0xf]
    %v1003 = vld [vmem:[#allocation2 + $0x118] sm:$0xf]
    %v1004 = vld [vmem:[#allocation2 + $0x11c] sm:$0xf]
    %v1005 = vld [vmem:[#allocation2 + $0x120] sm:$0xf]
    %v1006 = vld [vmem:[#allocation2 + $0x124] sm:$0xf]
    %v1007 = vld [vmem:[#allocation2 + $0x128] sm:$0xf]
    %v1008 = vld [vmem:[#allocation2 + $0x12c] sm:$0xf]
    %v1009 = vld [vmem:[#allocation2 + $0x130] sm:$0xf]
    %v1010 = vld [vmem:[#allocation2 + $0x134] sm:$0xf]
    %v1011 = vld [vmem:[#allocation2 + $0x138] sm:$0xf]
    %v1012 = vld [vmem:[#allocation2 + $0x13c] sm:$0xf]
    %v1013 = vld [vmem:[#allocation2 + $0x140] sm:$0xf]
    %v1014 = vld [vmem:[#allocation2 + $0x144] sm:$0xf]
    %v1015 = vld [vmem:[#allocation2 + $0x148] sm:$0xf]
    %v1016 = vld [vmem:[#allocation2 + $0x14c] sm:$0xf]
    %v1017 = vld [vmem:[#allocation2 + $0x150] sm:$0xf]
    %v1018 = vld [vmem:[#allocation2 + $0x154] sm:$0xf]
    %v1019 = vld [vmem:[#allocation2 + $0x158] sm:$0xf]
    %v1020 = vld [vmem:[#allocation2 + $0x15c] sm:$0xf]
    %v1021 = vld [vmem:[#allocation2 + $0x160] sm:$0xf]
    %v1022 = vld [vmem:[#allocation2 + $0x164] sm:$0xf]
    %v1023 = vld [vmem:[#allocation2 + $0x168] sm:$0xf]
    %v1024 = vld [vmem:[#allocation2 + $0x16c] sm:$0xf]
    %v1025 = vld [vmem:[#allocation2 + $0x170] sm:$0xf]
    %v1026 = vld [vmem:[#allocation2 + $0x174] sm:$0xf]
    %v1027 = vld [vmem:[#allocation2 + $0x178] sm:$0xf]
    %v1028 = vld [vmem:[#allocation2 + $0x17c] sm:$0xf]
    %v1029 = vld [vmem:[#allocation2 + $0x180] sm:$0xf]
    %v1030 = vld [vmem:[#allocation2 + $0x184] sm:$0xf]
    %v1031 = vld [vmem:[#allocation2 + $0x188] sm:$0xf]
    %v1032 = vld [vmem:[#allocation2 + $0x18c] sm:$0xf]
    %v1033 = vld [vmem:[#allocation2 + $0x190] sm:$0xf]
    %v1034 = vld [vmem:[#allocation2 + $0x194] sm:$0xf]
    %v1035 = vld [vmem:[#allocation2 + $0x198] sm:$0xf]
    %v1036 = vld [vmem:[#allocation2 + $0x19c] sm:$0xf]
    %v1037 = vld [vmem:[#allocation2 + $0x1a0] sm:$0xf]
    %v1038 = vld [vmem:[#allocation2 + $0x1a4] sm:$0xf]
    %v1039 = vld [vmem:[#allocation2 + $0x1a8] sm:$0xf]
    %v1040 = vld [vmem:[#allocation2 + $0x1ac] sm:$0xf]
    %v1041 = vld [vmem:[#allocation2 + $0x1b0] sm:$0xf]
    %v1042 = vld [vmem:[#allocation2 + $0x1b4] sm:$0xf]
    %v1043 = vld [vmem:[#allocation2 + $0x1b8] sm:$0xf]
    %v1044 = vld [vmem:[#allocation2 + $0x1bc] sm:$0xf]
    %v1045 = vld [vmem:[#allocation2 + $0x1c0] sm:$0xf]
    %v1046 = vld [vmem:[#allocation2 + $0x1c4] sm:$0xf]
    %v1047 = vld [vmem:[#allocation2 + $0x1c8] sm:$0xf]
    %v1048 = vld [vmem:[#allocation2 + $0x1cc] sm:$0xf]
    %v1049 = vld [vmem:[#allocation2 + $0x1d0] sm:$0xf]
    %v1050 = vld [vmem:[#allocation2 + $0x1d4] sm:$0xf]
    %v1051 = vld [vmem:[#allocation2 + $0x1d8] sm:$0xf]
    %v1052 = vld [vmem:[#allocation2 + $0x1dc] sm:$0xf]
    %v1053 = vld [vmem:[#allocation2 + $0x1e0] sm:$0xf]
    %v1054 = vld [vmem:[#allocation2 + $0x1e4] sm:$0xf]
    %v1055 = vld [vmem:[#allocation2 + $0x1e8] sm:$0xf]
    %v1056 = vld [vmem:[#allocation2 + $0x1ec] sm:$0xf]
    %v1057 = vld [vmem:[#allocation2 + $0x1f0] sm:$0xf]
    %v1058 = vld [vmem:[#allocation2 + $0x1f4] sm:$0xf]
    %v1059 = vld [vmem:[#allocation2 + $0x1f8] sm:$0xf]
    %v1060 = vld [vmem:[#allocation2 + $0x1fc] sm:$0xf]
    %v1061 = vld [vmem:[%s8] sm:$0x1]
    %v1063 = vperm.slane %v1061, 0
    %v1193 = vunpack.c.l.b16 %v933
    %v1194 = vunpack.c.l.b16 %v934
    %v1195 = vunpack.c.l.b16 %v935
    %v1196 = vunpack.c.l.b16 %v936
    %v1197 = vunpack.c.l.b16 %v937
    %v1198 = vunpack.c.l.b16 %v938
    %v1199 = vunpack.c.l.b16 %v939
    %v1200 = vunpack.c.l.b16 %v940
    %v1201 = vunpack.c.l.b16 %v941
    %v1202 = vunpack.c.l.b16 %v942
    %v1203 = vunpack.c.l.b16 %v943
    %v1204 = vunpack.c.l.b16 %v944
    %v1205 = vunpack.c.l.b16 %v945
    %v1206 = vunpack.c.l.b16 %v946
    %v1207 = vunpack.c.l.b16 %v947
    %v1208 = vunpack.c.l.b16 %v948
    %v1209 = vunpack.c.l.b16 %v949
    %v1210 = vunpack.c.l.b16 %v950
    %v1211 = vunpack.c.l.b16 %v951
    %v1212 = vunpack.c.l.b16 %v952
    %v1213 = vunpack.c.l.b16 %v953
    %v1214 = vunpack.c.l.b16 %v954
    %v1215 = vunpack.c.l.b16 %v955
    %v1216 = vunpack.c.l.b16 %v956
    %v1217 = vunpack.c.l.b16 %v957
    %v1218 = vunpack.c.l.b16 %v958
    %v1219 = vunpack.c.l.b16 %v959
    %v1220 = vunpack.c.l.b16 %v960
    %v1221 = vunpack.c.l.b16 %v961
    %v1222 = vunpack.c.l.b16 %v962
    %v1223 = vunpack.c.l.b16 %v963
    %v1224 = vunpack.c.l.b16 %v964
    %v1225 = vunpack.c.l.b16 %v965
    %v1226 = vunpack.c.l.b16 %v966
    %v1227 = vunpack.c.l.b16 %v967
    %v1228 = vunpack.c.l.b16 %v968
    %v1229 = vunpack.c.l.b16 %v969
    %v1230 = vunpack.c.l.b16 %v970
    %v1231 = vunpack.c.l.b16 %v971
    %v1232 = vunpack.c.l.b16 %v972
    %v1233 = vunpack.c.l.b16 %v973
    %v1234 = vunpack.c.l.b16 %v974
    %v1235 = vunpack.c.l.b16 %v975
    %v1236 = vunpack.c.l.b16 %v976
    %v1237 = vunpack.c.l.b16 %v977
    %v1238 = vunpack.c.l.b16 %v978
    %v1239 = vunpack.c.l.b16 %v979
    %v1240 = vunpack.c.l.b16 %v980
    %v1241 = vunpack.c.l.b16 %v981
    %v1242 = vunpack.c.l.b16 %v982
    %v1243 = vunpack.c.l.b16 %v983
    %v1244 = vunpack.c.l.b16 %v984
    %v1245 = vunpack.c.l.b16 %v985
    %v1246 = vunpack.c.l.b16 %v986
    %v1247 = vunpack.c.l.b16 %v987
    %v1248 = vunpack.c.l.b16 %v988
    %v1249 = vunpack.c.l.b16 %v989
    %v1250 = vunpack.c.l.b16 %v990
    %v1251 = vunpack.c.l.b16 %v991
    %v1252 = vunpack.c.l.b16 %v992
    %v1253 = vunpack.c.l.b16 %v993
    %v1254 = vunpack.c.l.b16 %v994
    %v1255 = vunpack.c.l.b16 %v995
    %v1256 = vunpack.c.l.b16 %v996
    %v1257 = vunpack.c.l.b16 %v997
    %v1258 = vunpack.c.l.b16 %v998
    %v1259 = vunpack.c.l.b16 %v999
    %v1260 = vunpack.c.l.b16 %v1000
    %v1261 = vunpack.c.l.b16 %v1001
    %v1262 = vunpack.c.l.b16 %v1002
    %v1263 = vunpack.c.l.b16 %v1003
    %v1264 = vunpack.c.l.b16 %v1004
    %v1265 = vunpack.c.l.b16 %v1005
    %v1266 = vunpack.c.l.b16 %v1006
    %v1267 = vunpack.c.l.b16 %v1007
    %v1268 = vunpack.c.l.b16 %v1008
    %v1269 = vunpack.c.l.b16 %v1009
    %v1270 = vunpack.c.l.b16 %v1010
    %v1271 = vunpack.c.l.b16 %v1011
    %v1272 = vunpack.c.l.b16 %v1012
    %v1273 = vunpack.c.l.b16 %v1013
    %v1274 = vunpack.c.l.b16 %v1014
    %v1275 = vunpack.c.l.b16 %v1015
    %v1276 = vunpack.c.l.b16 %v1016
    %v1277 = vunpack.c.l.b16 %v1017
    %v1278 = vunpack.c.l.b16 %v1018
    %v1279 = vunpack.c.l.b16 %v1019
    %v1280 = vunpack.c.l.b16 %v1020
    %v1281 = vunpack.c.l.b16 %v1021
    %v1282 = vunpack.c.l.b16 %v1022
    %v1283 = vunpack.c.l.b16 %v1023
    %v1284 = vunpack.c.l.b16 %v1024
    %v1285 = vunpack.c.l.b16 %v1025
    %v1286 = vunpack.c.l.b16 %v1026
    %v1287 = vunpack.c.l.b16 %v1027
    %v1288 = vunpack.c.l.b16 %v1028
    %v1289 = vunpack.c.l.b16 %v1029
    %v1290 = vunpack.c.l.b16 %v1030
    %v1291 = vunpack.c.l.b16 %v1031
    %v1292 = vunpack.c.l.b16 %v1032
    %v1293 = vunpack.c.l.b16 %v1033
    %v1294 = vunpack.c.l.b16 %v1034
    %v1295 = vunpack.c.l.b16 %v1035
    %v1296 = vunpack.c.l.b16 %v1036
    %v1297 = vunpack.c.l.b16 %v1037
    %v1298 = vunpack.c.l.b16 %v1038
    %v1299 = vunpack.c.l.b16 %v1039
    %v1300 = vunpack.c.l.b16 %v1040
    %v1301 = vunpack.c.l.b16 %v1041
    %v1302 = vunpack.c.l.b16 %v1042
    %v1303 = vunpack.c.l.b16 %v1043
    %v1304 = vunpack.c.l.b16 %v1044
    %v1305 = vunpack.c.l.b16 %v1045
    %v1306 = vunpack.c.l.b16 %v1046
    %v1307 = vunpack.c.l.b16 %v1047
    %v1308 = vunpack.c.l.b16 %v1048
    %v1309 = vunpack.c.l.b16 %v1049
    %v1310 = vunpack.c.l.b16 %v1050
    %v1311 = vunpack.c.l.b16 %v1051
    %v1312 = vunpack.c.l.b16 %v1052
    %v1313 = vunpack.c.l.b16 %v1053
    %v1314 = vunpack.c.l.b16 %v1054
    %v1315 = vunpack.c.l.b16 %v1055
    %v1316 = vunpack.c.l.b16 %v1056
    %v1317 = vunpack.c.l.b16 %v1057
    %v1318 = vunpack.c.l.b16 %v1058
    %v1319 = vunpack.c.l.b16 %v1059
    %v1320 = vunpack.c.l.b16 %v1060
    %v1321 = vpack.c.b16 %v1194, %v1193
    %v1322 = vpack.c.b16 %v1196, %v1195
    %v1323 = vpack.c.b16 %v1198, %v1197
    %v1324 = vpack.c.b16 %v1200, %v1199
    %v1325 = vpack.c.b16 %v1202, %v1201
    %v1326 = vpack.c.b16 %v1204, %v1203
    %v1327 = vpack.c.b16 %v1206, %v1205
    %v1328 = vpack.c.b16 %v1208, %v1207
    %v1329 = vpack.c.b16 %v1210, %v1209
    %v1330 = vpack.c.b16 %v1212, %v1211
    %v1331 = vpack.c.b16 %v1214, %v1213
    %v1332 = vpack.c.b16 %v1216, %v1215
    %v1333 = vpack.c.b16 %v1218, %v1217
    %v1334 = vpack.c.b16 %v1220, %v1219
    %v1335 = vpack.c.b16 %v1222, %v1221
    %v1336 = vpack.c.b16 %v1224, %v1223
    %v1337 = vpack.c.b16 %v1226, %v1225
    %v1338 = vpack.c.b16 %v1228, %v1227
    %v1339 = vpack.c.b16 %v1230, %v1229
    %v1340 = vpack.c.b16 %v1232, %v1231
    %v1341 = vpack.c.b16 %v1234, %v1233
    %v1342 = vpack.c.b16 %v1236, %v1235
    %v1343 = vpack.c.b16 %v1238, %v1237
    %v1344 = vpack.c.b16 %v1240, %v1239
    %v1345 = vpack.c.b16 %v1242, %v1241
    %v1346 = vpack.c.b16 %v1244, %v1243
    %v1347 = vpack.c.b16 %v1246, %v1245
    %v1348 = vpack.c.b16 %v1248, %v1247
    %v1349 = vpack.c.b16 %v1250, %v1249
    %v1350 = vpack.c.b16 %v1252, %v1251
    %v1351 = vpack.c.b16 %v1254, %v1253
    %v1352 = vpack.c.b16 %v1256, %v1255
    %v1353 = vpack.c.b16 %v1258, %v1257
    %v1354 = vpack.c.b16 %v1260, %v1259
    %v1355 = vpack.c.b16 %v1262, %v1261
    %v1356 = vpack.c.b16 %v1264, %v1263
    %v1357 = vpack.c.b16 %v1266, %v1265
    %v1358 = vpack.c.b16 %v1268, %v1267
    %v1359 = vpack.c.b16 %v1270, %v1269
    %v1360 = vpack.c.b16 %v1272, %v1271
    %v1361 = vpack.c.b16 %v1274, %v1273
    %v1362 = vpack.c.b16 %v1276, %v1275
    %v1363 = vpack.c.b16 %v1278, %v1277
    %v1364 = vpack.c.b16 %v1280, %v1279
    %v1365 = vpack.c.b16 %v1282, %v1281
    %v1366 = vpack.c.b16 %v1284, %v1283
    %v1367 = vpack.c.b16 %v1286, %v1285
    %v1368 = vpack.c.b16 %v1288, %v1287
    %v1369 = vpack.c.b16 %v1290, %v1289
    %v1370 = vpack.c.b16 %v1292, %v1291
    %v1371 = vpack.c.b16 %v1294, %v1293
    %v1372 = vpack.c.b16 %v1296, %v1295
    %v1373 = vpack.c.b16 %v1298, %v1297
    %v1374 = vpack.c.b16 %v1300, %v1299
    %v1375 = vpack.c.b16 %v1302, %v1301
    %v1376 = vpack.c.b16 %v1304, %v1303
    %v1377 = vpack.c.b16 %v1306, %v1305
    %v1378 = vpack.c.b16 %v1308, %v1307
    %v1379 = vpack.c.b16 %v1310, %v1309
    %v1380 = vpack.c.b16 %v1312, %v1311
    %v1381 = vpack.c.b16 %v1314, %v1313
    %v1382 = vpack.c.b16 %v1316, %v1315
    %v1383 = vpack.c.b16 %v1318, %v1317
    %v1384 = vpack.c.b16 %v1320, %v1319
    %1449 = vmatpush.bf16.msra.mxu0 %v1328
    %1450 = vmatpush.bf16.msra.mxu0 %v1327
    %1451 = vmatpush.bf16.msra.mxu0 %v1326
    %1452 = vmatpush.bf16.msra.mxu0 %v1325
    %1453 = vmatpush.bf16.msra.mxu0 %v1324
    %1454 = vmatpush.bf16.msra.mxu0 %v1323
    %1455 = vmatpush.bf16.msra.mxu0 %v1322
    %1456 = vmatpush.bf16.msra.mxu0 %v1321
    %1457 = vmatmul.bf16.gmra.mxu0 %v925
    %v1458 = vpop.f32.mrf.mxu0
    %v1459 = vadd.f32 %v1063, %v1458
    %v1460 = vpop.f32.mrf.mxu0
    %1461 = vdwg.mxu0
    %1462 = vmatpush.bf16.msra.mxu0 %v1336
    %1463 = vmatpush.bf16.msra.mxu0 %v1335
    %1464 = vmatpush.bf16.msra.mxu0 %v1334
    %1465 = vmatpush.bf16.msra.mxu0 %v1333
    %1466 = vmatpush.bf16.msra.mxu0 %v1332
    %1467 = vmatpush.bf16.msra.mxu0 %v1331
    %1468 = vmatpush.bf16.msra.mxu0 %v1330
    %1469 = vmatpush.bf16.msra.mxu0 %v1329
    %1470 = vmatmul.bf16.gmra.mxu0 %v926
    %v1471 = vpop.f32.mrf.mxu0
    %v1472 = vadd.f32 %v1459, %v1471
    %v1473 = vpop.f32.mrf.mxu0
    %1474 = vdwg.mxu0
    %1475 = vmatpush.bf16.msra.mxu0 %v1344
    %1476 = vmatpush.bf16.msra.mxu0 %v1343
    %1477 = vmatpush.bf16.msra.mxu0 %v1342
    %1478 = vmatpush.bf16.msra.mxu0 %v1341
    %1479 = vmatpush.bf16.msra.mxu0 %v1340
    %1480 = vmatpush.bf16.msra.mxu0 %v1339
    %1481 = vmatpush.bf16.msra.mxu0 %v1338
    %1482 = vmatpush.bf16.msra.mxu0 %v1337
    %1483 = vmatmul.bf16.gmra.mxu0 %v927
    %v1484 = vpop.f32.mrf.mxu0
    %v1485 = vadd.f32 %v1472, %v1484
    %v1486 = vpop.f32.mrf.mxu0
    %1487 = vdwg.mxu0
    %1488 = vmatpush.bf16.msra.mxu0 %v1352
    %1489 = vmatpush.bf16.msra.mxu0 %v1351
    %1490 = vmatpush.bf16.msra.mxu0 %v1350
    %1491 = vmatpush.bf16.msra.mxu0 %v1349
    %1492 = vmatpush.bf16.msra.mxu0 %v1348
    %1493 = vmatpush.bf16.msra.mxu0 %v1347
    %1494 = vmatpush.bf16.msra.mxu0 %v1346
    %1495 = vmatpush.bf16.msra.mxu0 %v1345
    %1496 = vmatmul.bf16.gmra.mxu0 %v928
    %v1497 = vpop.f32.mrf.mxu0
    %v1498 = vadd.f32 %v1485, %v1497
    %v1499 = vpop.f32.mrf.mxu0
    %1500 = vdwg.mxu0
    %1501 = vmatpush.bf16.msra.mxu0 %v1360
    %1502 = vmatpush.bf16.msra.mxu0 %v1359
    %1503 = vmatpush.bf16.msra.mxu0 %v1358
    %1504 = vmatpush.bf16.msra.mxu0 %v1357
    %1505 = vmatpush.bf16.msra.mxu0 %v1356
    %1506 = vmatpush.bf16.msra.mxu0 %v1355
    %1507 = vmatpush.bf16.msra.mxu0 %v1354
    %1508 = vmatpush.bf16.msra.mxu0 %v1353
    %1509 = vmatmul.bf16.gmra.mxu0 %v929
    %v1510 = vpop.f32.mrf.mxu0
    %v1511 = vadd.f32 %v1498, %v1510
    %v1512 = vpop.f32.mrf.mxu0
    %1513 = vdwg.mxu0
    %1514 = vmatpush.bf16.msra.mxu0 %v1368
    %1515 = vmatpush.bf16.msra.mxu0 %v1367
    %1516 = vmatpush.bf16.msra.mxu0 %v1366
    %1517 = vmatpush.bf16.msra.mxu0 %v1365
    %1518 = vmatpush.bf16.msra.mxu0 %v1364
    %1519 = vmatpush.bf16.msra.mxu0 %v1363
    %1520 = vmatpush.bf16.msra.mxu0 %v1362
    %1521 = vmatpush.bf16.msra.mxu0 %v1361
    %1522 = vmatmul.bf16.gmra.mxu0 %v930
    %v1523 = vpop.f32.mrf.mxu0
    %v1524 = vadd.f32 %v1511, %v1523
    %v1525 = vpop.f32.mrf.mxu0
    %1526 = vdwg.mxu0
    %1527 = vmatpush.bf16.msra.mxu0 %v1376
    %1528 = vmatpush.bf16.msra.mxu0 %v1375
    %1529 = vmatpush.bf16.msra.mxu0 %v1374
    %1530 = vmatpush.bf16.msra.mxu0 %v1373
    %1531 = vmatpush.bf16.msra.mxu0 %v1372
    %1532 = vmatpush.bf16.msra.mxu0 %v1371
    %1533 = vmatpush.bf16.msra.mxu0 %v1370
    %1534 = vmatpush.bf16.msra.mxu0 %v1369
    %1535 = vmatmul.bf16.gmra.mxu0 %v931
    %v1536 = vpop.f32.mrf.mxu0
    %v1537 = vadd.f32 %v1524, %v1536
    %v1538 = vpop.f32.mrf.mxu0
    %1539 = vdwg.mxu0
    %1540 = vmatpush.bf16.msra.mxu0 %v1384
    %1541 = vmatpush.bf16.msra.mxu0 %v1383
    %1542 = vmatpush.bf16.msra.mxu0 %v1382
    %1543 = vmatpush.bf16.msra.mxu0 %v1381
    %1544 = vmatpush.bf16.msra.mxu0 %v1380
    %1545 = vmatpush.bf16.msra.mxu0 %v1379
    %1546 = vmatpush.bf16.msra.mxu0 %v1378
    %1547 = vmatpush.bf16.msra.mxu0 %v1377
    %1548 = vmatmul.bf16.gmra.mxu0 %v932
    %v1549 = vpop.f32.mrf.mxu0
    %v1550 = vadd.f32 %v1537, %v1549
    %v1551 = vpop.f32.mrf.mxu0
    %1552 = vdwg.mxu0
    %v1553 = vmax.f32 %v1550, 0.0
    %v1554 = vpack.c.bf16 %v1553, %v1553
    %v1555 = vld [vmem:[%s9] sm:$0xf]
    %v1556 = vld [vmem:[%s9 + $0x4] sm:$0xf]
    %v1557 = vld [vmem:[%s9 + $0x8] sm:$0xf]
    %v1558 = vld [vmem:[%s9 + $0xc] sm:$0xf]
    %v1559 = vld [vmem:[%s9 + $0x10] sm:$0xf]
    %v1560 = vld [vmem:[%s9 + $0x14] sm:$0xf]
    %v1561 = vld [vmem:[%s9 + $0x18] sm:$0xf]
    %v1562 = vld [vmem:[%s9 + $0x1c] sm:$0xf]
    %v1563 = vld [vmem:[%s9 + $0x20] sm:$0xf]
    %v1564 = vld [vmem:[%s9 + $0x24] sm:$0xf]
    %v1565 = vld [vmem:[%s9 + $0x28] sm:$0xf]
    %v1566 = vld [vmem:[%s9 + $0x2c] sm:$0xf]
    %v1567 = vld [vmem:[%s9 + $0x30] sm:$0xf]
    %v1568 = vld [vmem:[%s9 + $0x34] sm:$0xf]
    %v1569 = vld [vmem:[%s9 + $0x38] sm:$0xf]
    %v1570 = vld [vmem:[%s9 + $0x3c] sm:$0xf]
    %v1571 = vld [vmem:[%s10] sm:$0x1]
    %v1573 = vperm.slane %v1571, 0
    %v1591 = vunpack.c.l.b16 %v1555
    %v1592 = vunpack.c.l.b16 %v1556
    %v1593 = vunpack.c.l.b16 %v1557
    %v1594 = vunpack.c.l.b16 %v1558
    %v1595 = vunpack.c.l.b16 %v1559
    %v1596 = vunpack.c.l.b16 %v1560
    %v1597 = vunpack.c.l.b16 %v1561
    %v1598 = vunpack.c.l.b16 %v1562
    %v1599 = vunpack.c.l.b16 %v1563
    %v1600 = vunpack.c.l.b16 %v1564
    %v1601 = vunpack.c.l.b16 %v1565
    %v1602 = vunpack.c.l.b16 %v1566
    %v1603 = vunpack.c.l.b16 %v1567
    %v1604 = vunpack.c.l.b16 %v1568
    %v1605 = vunpack.c.l.b16 %v1569
    %v1606 = vunpack.c.l.b16 %v1570
    %v1607 = vpack.c.b16 %v1592, %v1591
    %v1608 = vpack.c.b16 %v1594, %v1593
    %v1609 = vpack.c.b16 %v1596, %v1595
    %v1610 = vpack.c.b16 %v1598, %v1597
    %v1611 = vpack.c.b16 %v1600, %v1599
    %v1612 = vpack.c.b16 %v1602, %v1601
    %v1613 = vpack.c.b16 %v1604, %v1603
    %v1614 = vpack.c.b16 %v1606, %v1605
    %1623 = vmatpush.bf16.msra.mxu0 %v1614
    %1624 = vmatpush.bf16.msra.mxu0 %v1613
    %1625 = vmatpush.bf16.msra.mxu0 %v1612
    %1626 = vmatpush.bf16.msra.mxu0 %v1611
    %1627 = vmatpush.bf16.msra.mxu0 %v1610
    %1628 = vmatpush.bf16.msra.mxu0 %v1609
    %1629 = vmatpush.bf16.msra.mxu0 %v1608
    %1630 = vmatpush.bf16.msra.mxu0 %v1607
    %1631 = vmatmul.bf16.gmra.mxu0 %v1554
    %v1632 = vpop.f32.mrf.mxu0
    %v1633 = vadd.f32 %v1573, %v1632
    %v1634 = vpop.f32.mrf.mxu0
    %1635 = vdwg.mxu0
    %1636 = vst [vmem:[%s13] sm:$0xff] %v1633
    // Predicated region
    $region50: #{triplet_net_forward.1} parent=1 // pred_check
      _
    $region51: #{triplet_net_forward.1} parent=1 // pred_check_branch
      %1638 = sbr.rel (0) target = $region53
    $region52: #{triplet_net_forward.1} parent=1 // pred_region
      _
    $region53: #{triplet_net_forward.1} parent=1 // pred_fallthru
      _
    // Predicated region
    $region54: #{triplet_net_forward.1} parent=1 // pred_check
      _
    $region55: #{triplet_net_forward.1} parent=1 // pred_check_branch
      %1640 = sbr.rel (0) target = $region57
    $region56: #{triplet_net_forward.1} parent=1 // pred_region
      _
    $region57: #{triplet_net_forward.1} parent=1 // pred_fallthru
      _
    // Predicated region
    $region58: #{triplet_net_forward.1} parent=1 // pred_check
      _
    $region59: #{triplet_net_forward.1} parent=1 // pred_check_branch
      %1642 = sbr.rel (0) target = $region61
    $region60: #{triplet_net_forward.1} parent=1 // pred_region
      _
    $region61: #{triplet_net_forward.1} parent=1 // pred_fallthru
      _
    // Predicated region
    $region62: #{triplet_net_forward.1} parent=1 // pred_check
      _
    $region63: #{triplet_net_forward.1} parent=1 // pred_check_branch
      %1644 = sbr.rel (0) target = $region65
    $region64: #{triplet_net_forward.1} parent=1 // pred_region
      _
    $region65: #{triplet_net_forward.1} parent=1 // pred_fallthru
      _
    // Predicated region
    $region66: #{triplet_net_forward.1} parent=1 // pred_check
      _
    $region67: #{triplet_net_forward.1} parent=1 // pred_check_branch
      %1646 = sbr.rel (0) target = $region69
    $region68: #{triplet_net_forward.1} parent=1 // pred_region
      _
    $region69: #{triplet_net_forward.1} parent=1 // pred_fallthru
      _
    // Predicated region
    $region70: #{triplet_net_forward.1} parent=1 // pred_check
      _
    $region71: #{triplet_net_forward.1} parent=1 // pred_check_branch
      %1648 = sbr.rel (0) target = $region73
    $region72: #{triplet_net_forward.1} parent=1 // pred_region
      _
    $region73: #{triplet_net_forward.1} parent=1 // pred_fallthru
      _
    %1649 = vsyncpa [#allocation3], 1

</llo_original>
